<compile_context>
chip_gen: v5e
topology: v5e:2x2
jax: 0.10.0
libtpu: 0.0.40
codegen_flags: <defaults>
</compile_context>

<pallas_src>
import jax
import jax.numpy as jnp
from jax.experimental import pallas as pl
from jax.experimental.pallas import tpu as pltpu

# --- model hyper-parameters (toy sizes, faithful to the module's structure) ---
D_MODEL = 32
N_HEAD = 4
SEQ = 8
BATCH = 2
EPS = 1e-5          # nn.LayerNorm default
NEG_INF = -1e30     # finite "−inf" for the additive mask (NaN-safe)


def _layer_norm_f32(x, g, b):
    """LayerNorm over the last axis in float32 (matches the fp16-safe subclass)."""
    xf = x.astype(jnp.float32)
    mu = jnp.mean(xf, axis=-1, keepdims=True)
    var = jnp.mean((xf - mu) ** 2, axis=-1, keepdims=True)
    return (xf - mu) * jax.lax.rsqrt(var + EPS) * g + b


def residual_block_kernel(
    x_ref,                      # (B*S, D)   batch-major rows
    mask_ref,                   # (S, S)     additive attention mask
    ln1_g_ref, ln1_b_ref,       # (1, D)
    wq_ref, bq_ref,             # (H, D, hd), (H, 1, hd)   (1/sqrt(hd) already folded in)
    wk_ref, bk_ref,             # (H, D, hd), (H, 1, hd)
    wv_ref, bv_ref,             # (H, D, hd), (H, 1, hd)
    wo_ref, bo_ref,             # (H, hd, D), (1, D)
    ln2_g_ref, ln2_b_ref,       # (1, D)
    wfc_ref, bfc_ref,           # (D, 4D), (1, 4D)         pre-transposed (D_in, D_out)
    wproj_ref, bproj_ref,       # (4D, D), (1, D)          pre-transposed (D_in, D_out)
    o_ref,                      # (B*S, D)
):
    n, d = x_ref.shape
    s = mask_ref.shape[0]
    b = n // s
    n_head, _, hd = wq_ref.shape

    x = x_ref[...].astype(jnp.float32)

    # ---- x = x + attn(ln_1(x)) ------------------------------------------------
    h = _layer_norm_f32(x, ln1_g_ref[...], ln1_b_ref[...])                # (N, D)
    mask = mask_ref[...][None, :, :]                                      # (1, S, S)

    attn = jnp.zeros((n, d), jnp.float32)
    # Static unroll over heads: with per-head pre-split weights each head is a
    # clean matmul -> batched einsum -> matmul accumulate (no slices / concat).
    for hi in range(n_head):
        q = (jnp.dot(h, wq_ref[hi], preferred_element_type=jnp.float32)
             + bq_ref[hi]).reshape(b, s, hd)
        k = (jnp.dot(h, wk_ref[hi], preferred_element_type=jnp.float32)
             + bk_ref[hi]).reshape(b, s, hd)
        v = (jnp.dot(h, wv_ref[hi], preferred_element_type=jnp.float32)
             + bv_ref[hi]).reshape(b, s, hd)

        sc = jnp.einsum("bqd,bkd->bqk", q, k,
                        preferred_element_type=jnp.float32) + mask        # (B, S, S)
        m = jnp.max(sc, axis=-1, keepdims=True)
        p = jnp.exp(sc - m)
        p = p * pl.reciprocal(jnp.sum(p, axis=-1, keepdims=True), approx=True)
        ctx = jnp.einsum("bqk,bkd->bqd", p, v,
                         preferred_element_type=jnp.float32).reshape(n, hd)
        # per-head slice of the output projection, accumulated (== concat @ W_out^T)
        attn = attn + jnp.dot(ctx, wo_ref[hi], preferred_element_type=jnp.float32)

    x = x + attn + bo_ref[...]

    # ---- x = x + mlp(ln_2(x)) ---------------------------------------------------
    h2 = _layer_norm_f32(x, ln2_g_ref[...], ln2_b_ref[...])
    fc = jnp.dot(h2, wfc_ref[...], preferred_element_type=jnp.float32) + bfc_ref[...]
    fc = fc * jax.nn.sigmoid(1.702 * fc)                                  # QuickGELU
    proj = jnp.dot(fc, wproj_ref[...], preferred_element_type=jnp.float32) + bproj_ref[...]

    o_ref[...] = (x + proj).astype(o_ref.dtype)


_PARAM_ORDER = (
    "ln1_g", "ln1_b",
    "wq_h", "bq_h", "wk_h", "bk_h", "wv_h", "bv_h",
    "wo_h", "b_out",
    "ln2_g", "ln2_b",
    "w_fc_t", "b_fc", "w_proj_t", "b_proj",
)


def residual_attention_block(x_sbd, prepared, attn_mask):
    """x_sbd: (seq, batch, d_model) like torch nn.MultiheadAttention. Returns same layout."""
    S, B, D = x_sbd.shape
    # TODO(synk): at real CLIP scale, feed batch-major activations (or fold this layout
    # change into the block specs of a tiled version) so these transposes don't cost an
    # extra HBM pass outside the kernel.
    x2d = jnp.transpose(x_sbd, (1, 0, 2)).reshape(B * S, D)

    operands = (x2d, attn_mask) + tuple(prepared[k] for k in _PARAM_ORDER)
    vmem = pl.BlockSpec(memory_space=pltpu.MemorySpace.VMEM)

    out2d = pl.pallas_call(
        residual_block_kernel,
        out_shape=jax.ShapeDtypeStruct((B * S, D), x_sbd.dtype),
        in_specs=[vmem] * len(operands),
        out_specs=vmem,
        compiler_params=pltpu.CompilerParams(vmem_limit_bytes=64 << 20),
    )(*operands)

    return jnp.transpose(out2d.reshape(B, S, D), (1, 0, 2))


def init_params(key, d_model):
    """Deterministic synthetic parameters in the torch module's native layout."""
    ks = jax.random.split(key, 6)
    scale = 0.02
    f32 = jnp.float32
    return {
        "ln1_g": jnp.ones((1, d_model), f32),
        "ln1_b": jnp.zeros((1, d_model), f32),
        "w_in": scale * jax.random.normal(ks[0], (3 * d_model, d_model), f32),
        "b_in": scale * jax.random.normal(ks[1], (1, 3 * d_model), f32),
        "w_out": scale * jax.random.normal(ks[2], (d_model, d_model), f32),
        "b_out": jnp.zeros((1, d_model), f32),
        "ln2_g": jnp.ones((1, d_model), f32),
        "ln2_b": jnp.zeros((1, d_model), f32),
        "w_fc": scale * jax.random.normal(ks[3], (4 * d_model, d_model), f32),
        "b_fc": scale * jax.random.normal(ks[4], (1, 4 * d_model), f32),
        "w_proj": scale * jax.random.normal(ks[5], (d_model, 4 * d_model), f32),
        "b_proj": jnp.zeros((1, d_model), f32),
    }


def prepare_params(p, d_model, n_head):
    """One-time host-side prep: pre-transpose, split per head, fold the attention scale."""
    hd = d_model // n_head
    scale = 1.0 / (hd ** 0.5)

    w_in = p["w_in"]                    # (3D, D) torch in_proj_weight = [Wq; Wk; Wv]
    b_in = p["b_in"].reshape(-1)        # (3D,)
    wq, wk, wv = (w_in[i * d_model:(i + 1) * d_model] for i in range(3))
    bq, bk, bv = (b_in[i * d_model:(i + 1) * d_model] for i in range(3))

    def heads_w(w):   # (D, D) torch (out, in) -> (H, D, hd) pre-transposed per head
        return jnp.stack([w[i * hd:(i + 1) * hd, :].T for i in range(n_head)])

    def heads_b(bias):  # (D,) -> (H, 1, hd)
        return jnp.stack([bias[i * hd:(i + 1) * hd].reshape(1, hd) for i in range(n_head)])

    w_out = p["w_out"]                  # (D, D) torch (out, in)
    wo_h = jnp.stack([w_out[:, i * hd:(i + 1) * hd].T for i in range(n_head)])  # (H, hd, D)

    return {
        "ln1_g": p["ln1_g"], "ln1_b": p["ln1_b"],
        "wq_h": heads_w(wq) * scale, "bq_h": heads_b(bq) * scale,
        "wk_h": heads_w(wk), "bk_h": heads_b(bk),
        "wv_h": heads_w(wv), "bv_h": heads_b(bv),
        "wo_h": wo_h, "b_out": p["b_out"],
        "ln2_g": p["ln2_g"], "ln2_b": p["ln2_b"],
        "w_fc_t": p["w_fc"].T, "b_fc": p["b_fc"],
        "w_proj_t": p["w_proj"].T, "b_proj": p["b_proj"],
    }


def build_causal_mask(seq):
    # CLIP text encoder: additive causal mask. Finite large negative == -inf for softmax,
    # but NaN-safe under full-row masking / reduced precision.
    row = jnp.arange(seq)[:, None]
    col = jnp.arange(seq)[None, :]
    return jnp.where(col > row, NEG_INF, 0.0).astype(jnp.float32)


def reference_block(x_sbd, p, mask):
    """Pure-JAX reference of the torch module (for correctness check)."""
    S, B, D = x_sbd.shape
    H = N_HEAD
    hd = D // H

    def ln(x, g, b):
        mu = jnp.mean(x, -1, keepdims=True)
        var = jnp.mean((x - mu) ** 2, -1, keepdims=True)
        return (x - mu) * jax.lax.rsqrt(var + EPS) * g.reshape(-1) + b.reshape(-1)

    x = x_sbd.astype(jnp.float32)
    h = ln(x, p["ln1_g"], p["ln1_b"])
    qkv = h @ p["w_in"].T + p["b_in"].reshape(-1)
    q, k, v = jnp.split(qkv, 3, axis=-1)
    q = q * (hd ** -0.5)

    def sp(t):  # (S,B,D) -> (B,H,S,hd)
        return jnp.transpose(t.reshape(S, B, H, hd), (1, 2, 0, 3))

    sc = jnp.einsum("bhqd,bhkd->bhqk", sp(q), sp(k)) + mask
    a = jax.nn.softmax(sc, axis=-1)
    ctx = jnp.einsum("bhqk,bhkd->bhqd", a, sp(v))
    ctx = jnp.transpose(ctx, (2, 0, 1, 3)).reshape(S, B, D)
    x = x + ctx @ p["w_out"].T + p["b_out"].reshape(-1)

    h2 = ln(x, p["ln2_g"], p["ln2_b"])
    fc = h2 @ p["w_fc"].T + p["b_fc"].reshape(-1)
    fc = fc * jax.nn.sigmoid(1.702 * fc)
    return x + fc @ p["w_proj"].T + p["b_proj"].reshape(-1)


if __name__ == "__main__":
    key = jax.random.PRNGKey(0)
    k_x, k_p = jax.random.split(key)

    # (seq, batch, d_model) — torch nn.MultiheadAttention convention
    x = jax.random.normal(k_x, (SEQ, BATCH, D_MODEL), jnp.float32)
    torch_params = init_params(k_p, D_MODEL)
    prepared = prepare_params(torch_params, D_MODEL, N_HEAD)
    mask = build_causal_mask(SEQ)

    y = residual_attention_block(x, prepared, mask)
    jax.block_until_ready(y)
    assert y.shape == (SEQ, BATCH, D_MODEL)

    y_ref = reference_block(x, torch_params, mask)
    err = float(jnp.max(jnp.abs(y - y_ref)))
    assert err < 5e-3, f"kernel/reference mismatch: max abs err = {err}"
    print("KERNEL_OK")
</pallas_src>

<mosaic_0001>
module attributes {stable_mosaic.version = 11 : i64} {
  func.func @residual_block_kernel(%arg0: memref<16x32xf32, #tpu.memory_space<vmem>>, %arg1: memref<8x8xf32, #tpu.memory_space<vmem>>, %arg2: memref<1x32xf32, #tpu.memory_space<vmem>>, %arg3: memref<1x32xf32, #tpu.memory_space<vmem>>, %arg4: memref<4x32x8xf32, #tpu.memory_space<vmem>>, %arg5: memref<4x1x8xf32, #tpu.memory_space<vmem>>, %arg6: memref<4x32x8xf32, #tpu.memory_space<vmem>>, %arg7: memref<4x1x8xf32, #tpu.memory_space<vmem>>, %arg8: memref<4x32x8xf32, #tpu.memory_space<vmem>>, %arg9: memref<4x1x8xf32, #tpu.memory_space<vmem>>, %arg10: memref<4x8x32xf32, #tpu.memory_space<vmem>>, %arg11: memref<1x32xf32, #tpu.memory_space<vmem>>, %arg12: memref<1x32xf32, #tpu.memory_space<vmem>>, %arg13: memref<1x32xf32, #tpu.memory_space<vmem>>, %arg14: memref<32x128xf32, #tpu.memory_space<vmem>>, %arg15: memref<1x128xf32, #tpu.memory_space<vmem>>, %arg16: memref<128x32xf32, #tpu.memory_space<vmem>>, %arg17: memref<1x32xf32, #tpu.memory_space<vmem>>, %arg18: memref<16x32xf32, #tpu.memory_space<vmem>>) attributes {dimension_semantics = [], scalar_prefetch = 0 : i64, scratch_operands = 0 : i64, tpu.core_type = #tpu.core_type<tc>} {
    %c0 = arith.constant 0 : index
    %c0_0 = arith.constant 0 : index
    %0 = vector.load %arg0[%c0, %c0_0] : memref<16x32xf32, #tpu.memory_space<vmem>>, vector<16x32xf32>
    %c0_1 = arith.constant 0 : index
    %c0_2 = arith.constant 0 : index
    %1 = vector.load %arg2[%c0_1, %c0_2] : memref<1x32xf32, #tpu.memory_space<vmem>>, vector<1x32xf32>
    %c0_3 = arith.constant 0 : index
    %c0_4 = arith.constant 0 : index
    %2 = vector.load %arg3[%c0_3, %c0_4] : memref<1x32xf32, #tpu.memory_space<vmem>>, vector<1x32xf32>
    %cst = arith.constant dense<0.000000e+00> : vector<16xf32>
    %3 = vector.multi_reduction <add>, %0, %cst [1] : vector<16x32xf32> to vector<16xf32>
    %4 = vector.shape_cast %3 : vector<16xf32> to vector<16x1xf32>
    %cst_5 = arith.constant 3.200000e+01 : f32
    %5 = vector.broadcast %cst_5 : f32 to vector<16x1xf32>
    %6 = arith.divf %4, %5 : vector<16x1xf32>
    %7 = vector.broadcast %6 : vector<16x1xf32> to vector<16x32xf32>
    %8 = arith.subf %0, %7 : vector<16x32xf32>
    %9 = arith.mulf %8, %8 : vector<16x32xf32>
    %cst_6 = arith.constant dense<0.000000e+00> : vector<16xf32>
    %10 = vector.multi_reduction <add>, %9, %cst_6 [1] : vector<16x32xf32> to vector<16xf32>
    %11 = vector.shape_cast %10 : vector<16xf32> to vector<16x1xf32>
    %cst_7 = arith.constant 3.200000e+01 : f32
    %12 = vector.broadcast %cst_7 : f32 to vector<16x1xf32>
    %13 = arith.divf %11, %12 : vector<16x1xf32>
    %14 = vector.broadcast %6 : vector<16x1xf32> to vector<16x32xf32>
    %15 = arith.subf %0, %14 : vector<16x32xf32>
    %cst_8 = arith.constant 9.99999974E-6 : f32
    %16 = vector.broadcast %cst_8 : f32 to vector<16x1xf32>
    %17 = arith.addf %13, %16 : vector<16x1xf32>
    %18 = math.rsqrt %17 : vector<16x1xf32>
    %19 = vector.broadcast %18 : vector<16x1xf32> to vector<16x32xf32>
    %20 = arith.mulf %15, %19 : vector<16x32xf32>
    %21 = vector.broadcast %1 : vector<1x32xf32> to vector<16x32xf32>
    %22 = arith.mulf %20, %21 : vector<16x32xf32>
    %23 = vector.broadcast %2 : vector<1x32xf32> to vector<16x32xf32>
    %24 = arith.addf %22, %23 : vector<16x32xf32>
    %c0_9 = arith.constant 0 : index
    %c0_10 = arith.constant 0 : index
    %25 = vector.load %arg1[%c0_9, %c0_10] : memref<8x8xf32, #tpu.memory_space<vmem>>, vector<8x8xf32>
    %26 = vector.shape_cast %25 : vector<8x8xf32> to vector<1x8x8xf32>
    %cst_11 = arith.constant 0.000000e+00 : f32
    %27 = vector.broadcast %cst_11 : f32 to vector<16x32xf32>
    %c0_12 = arith.constant 0 : index
    %c0_13 = arith.constant 0 : index
    %c0_14 = arith.constant 0 : index
    %28 = vector.load %arg4[%c0_12, %c0_13, %c0_14] : memref<4x32x8xf32, #tpu.memory_space<vmem>>, vector<1x32x8xf32>
    %29 = vector.shape_cast %28 : vector<1x32x8xf32> to vector<32x8xf32>
    %cst_15 = arith.constant dense<0.000000e+00> : vector<16x8xf32>
    %30 = tpu.matmul %24, %29, %cst_15 {dimension_numbers = #tpu.dot_dimension_numbers<[1], [0], [0], [1], [0, 0, 1, 1], [], []>} : vector<16x32xf32>, vector<32x8xf32>, vector<16x8xf32> -> vector<16x8xf32>
    %c0_16 = arith.constant 0 : index
    %c0_17 = arith.constant 0 : index
    %c0_18 = arith.constant 0 : index
    %31 = vector.load %arg5[%c0_16, %c0_17, %c0_18] : memref<4x1x8xf32, #tpu.memory_space<vmem>>, vector<1x1x8xf32>
    %32 = vector.shape_cast %31 : vector<1x1x8xf32> to vector<1x8xf32>
    %33 = vector.broadcast %32 : vector<1x8xf32> to vector<16x8xf32>
    %34 = arith.addf %30, %33 : vector<16x8xf32>
    %35 = vector.shape_cast %34 : vector<16x8xf32> to vector<2x8x8xf32>
    %c0_19 = arith.constant 0 : index
    %c0_20 = arith.constant 0 : index
    %c0_21 = arith.constant 0 : index
    %36 = vector.load %arg6[%c0_19, %c0_20, %c0_21] : memref<4x32x8xf32, #tpu.memory_space<vmem>>, vector<1x32x8xf32>
    %37 = vector.shape_cast %36 : vector<1x32x8xf32> to vector<32x8xf32>
    %cst_22 = arith.constant dense<0.000000e+00> : vector<16x8xf32>
    %38 = tpu.matmul %24, %37, %cst_22 {dimension_numbers = #tpu.dot_dimension_numbers<[1], [0], [0], [1], [0, 0, 1, 1], [], []>} : vector<16x32xf32>, vector<32x8xf32>, vector<16x8xf32> -> vector<16x8xf32>
    %c0_23 = arith.constant 0 : index
    %c0_24 = arith.constant 0 : index
    %c0_25 = arith.constant 0 : index
    %39 = vector.load %arg7[%c0_23, %c0_24, %c0_25] : memref<4x1x8xf32, #tpu.memory_space<vmem>>, vector<1x1x8xf32>
    %40 = vector.shape_cast %39 : vector<1x1x8xf32> to vector<1x8xf32>
    %41 = vector.broadcast %40 : vector<1x8xf32> to vector<16x8xf32>
    %42 = arith.addf %38, %41 : vector<16x8xf32>
    %43 = vector.shape_cast %42 : vector<16x8xf32> to vector<2x8x8xf32>
    %c0_26 = arith.constant 0 : index
    %c0_27 = arith.constant 0 : index
    %c0_28 = arith.constant 0 : index
    %44 = vector.load %arg8[%c0_26, %c0_27, %c0_28] : memref<4x32x8xf32, #tpu.memory_space<vmem>>, vector<1x32x8xf32>
    %45 = vector.shape_cast %44 : vector<1x32x8xf32> to vector<32x8xf32>
    %cst_29 = arith.constant dense<0.000000e+00> : vector<16x8xf32>
    %46 = tpu.matmul %24, %45, %cst_29 {dimension_numbers = #tpu.dot_dimension_numbers<[1], [0], [0], [1], [0, 0, 1, 1], [], []>} : vector<16x32xf32>, vector<32x8xf32>, vector<16x8xf32> -> vector<16x8xf32>
    %c0_30 = arith.constant 0 : index
    %c0_31 = arith.constant 0 : index
    %c0_32 = arith.constant 0 : index
    %47 = vector.load %arg9[%c0_30, %c0_31, %c0_32] : memref<4x1x8xf32, #tpu.memory_space<vmem>>, vector<1x1x8xf32>
    %48 = vector.shape_cast %47 : vector<1x1x8xf32> to vector<1x8xf32>
    %49 = vector.broadcast %48 : vector<1x8xf32> to vector<16x8xf32>
    %50 = arith.addf %46, %49 : vector<16x8xf32>
    %51 = vector.shape_cast %50 : vector<16x8xf32> to vector<2x8x8xf32>
    "tpu.trace_start"() <{level = 10 : i32, message = "bqd,bkd->bqk"}> : () -> ()
    %cst_33 = arith.constant dense<0.000000e+00> : vector<2x8x8xf32>
    %52 = tpu.matmul %35, %43, %cst_33 {dimension_numbers = #tpu.dot_dimension_numbers<[2], [2], [1], [1], [0, 0, 0, 1, 1, 1], [0], [0]>} : vector<2x8x8xf32>, vector<2x8x8xf32>, vector<2x8x8xf32> -> vector<2x8x8xf32>
    "tpu.trace_stop"() : () -> ()
    %53 = vector.broadcast %26 : vector<1x8x8xf32> to vector<2x8x8xf32>
    %54 = arith.addf %52, %53 : vector<2x8x8xf32>
    %cst_34 = arith.constant dense<0xFF800000> : vector<2x8xf32>
    %55 = vector.multi_reduction <maximumf>, %54, %cst_34 [2] : vector<2x8x8xf32> to vector<2x8xf32>
    %56 = vector.shape_cast %55 : vector<2x8xf32> to vector<2x8x1xf32>
    %57 = vector.broadcast %56 : vector<2x8x1xf32> to vector<2x8x8xf32>
    %58 = arith.subf %54, %57 : vector<2x8x8xf32>
    %59 = math.exp %58 : vector<2x8x8xf32>
    %cst_35 = arith.constant dense<0.000000e+00> : vector<2x8xf32>
    %60 = vector.multi_reduction <add>, %59, %cst_35 [2] : vector<2x8x8xf32> to vector<2x8xf32>
    %61 = vector.shape_cast %60 : vector<2x8xf32> to vector<2x8x1xf32>
    %62 = tpu.reciprocal %61 {approx = true} : vector<2x8x1xf32> -> vector<2x8x1xf32>
    %63 = vector.broadcast %62 : vector<2x8x1xf32> to vector<2x8x8xf32>
    %64 = arith.mulf %59, %63 : vector<2x8x8xf32>
    "tpu.trace_start"() <{level = 10 : i32, message = "bqk,bkd->bqd"}> : () -> ()
    %cst_36 = arith.constant dense<0.000000e+00> : vector<2x8x8xf32>
    %65 = tpu.matmul %64, %51, %cst_36 {dimension_numbers = #tpu.dot_dimension_numbers<[2], [1], [1], [2], [0, 0, 0, 1, 1, 2], [0], [0]>} : vector<2x8x8xf32>, vector<2x8x8xf32>, vector<2x8x8xf32> -> vector<2x8x8xf32>
    "tpu.trace_stop"() : () -> ()
    %66 = vector.shape_cast %65 : vector<2x8x8xf32> to vector<16x8xf32>
    %c0_37 = arith.constant 0 : index
    %c0_38 = arith.constant 0 : index
    %c0_39 = arith.constant 0 : index
    %67 = vector.load %arg10[%c0_37, %c0_38, %c0_39] : memref<4x8x32xf32, #tpu.memory_space<vmem>>, vector<1x8x32xf32>
    %68 = vector.shape_cast %67 : vector<1x8x32xf32> to vector<8x32xf32>
    %cst_40 = arith.constant dense<0.000000e+00> : vector<16x32xf32>
    %69 = tpu.matmul %66, %68, %cst_40 {dimension_numbers = #tpu.dot_dimension_numbers<[1], [0], [0], [1], [0, 0, 1, 1], [], []>} : vector<16x8xf32>, vector<8x32xf32>, vector<16x32xf32> -> vector<16x32xf32>
    %70 = arith.addf %27, %69 : vector<16x32xf32>
    %c1 = arith.constant 1 : index
    %c0_41 = arith.constant 0 : index
    %c0_42 = arith.constant 0 : index
    %71 = vector.load %arg4[%c1, %c0_41, %c0_42] : memref<4x32x8xf32, #tpu.memory_space<vmem>>, vector<1x32x8xf32>
    %72 = vector.shape_cast %71 : vector<1x32x8xf32> to vector<32x8xf32>
    %cst_43 = arith.constant dense<0.000000e+00> : vector<16x8xf32>
    %73 = tpu.matmul %24, %72, %cst_43 {dimension_numbers = #tpu.dot_dimension_numbers<[1], [0], [0], [1], [0, 0, 1, 1], [], []>} : vector<16x32xf32>, vector<32x8xf32>, vector<16x8xf32> -> vector<16x8xf32>
    %c1_44 = arith.constant 1 : index
    %c0_45 = arith.constant 0 : index
    %c0_46 = arith.constant 0 : index
    %74 = vector.load %arg5[%c1_44, %c0_45, %c0_46] : memref<4x1x8xf32, #tpu.memory_space<vmem>>, vector<1x1x8xf32>
    %75 = vector.shape_cast %74 : vector<1x1x8xf32> to vector<1x8xf32>
    %76 = vector.broadcast %75 : vector<1x8xf32> to vector<16x8xf32>
    %77 = arith.addf %73, %76 : vector<16x8xf32>
    %78 = vector.shape_cast %77 : vector<16x8xf32> to vector<2x8x8xf32>
    %c1_47 = arith.constant 1 : index
    %c0_48 = arith.constant 0 : index
    %c0_49 = arith.constant 0 : index
    %79 = vector.load %arg6[%c1_47, %c0_48, %c0_49] : memref<4x32x8xf32, #tpu.memory_space<vmem>>, vector<1x32x8xf32>
    %80 = vector.shape_cast %79 : vector<1x32x8xf32> to vector<32x8xf32>
    %cst_50 = arith.constant dense<0.000000e+00> : vector<16x8xf32>
    %81 = tpu.matmul %24, %80, %cst_50 {dimension_numbers = #tpu.dot_dimension_numbers<[1], [0], [0], [1], [0, 0, 1, 1], [], []>} : vector<16x32xf32>, vector<32x8xf32>, vector<16x8xf32> -> vector<16x8xf32>
    %c1_51 = arith.constant 1 : index
    %c0_52 = arith.constant 0 : index
    %c0_53 = arith.constant 0 : index
    %82 = vector.load %arg7[%c1_51, %c0_52, %c0_53] : memref<4x1x8xf32, #tpu.memory_space<vmem>>, vector<1x1x8xf32>
    %83 = vector.shape_cast %82 : vector<1x1x8xf32> to vector<1x8xf32>
    %84 = vector.broadcast %83 : vector<1x8xf32> to vector<16x8xf32>
    %85 = arith.addf %81, %84 : vector<16x8xf32>
    %86 = vector.shape_cast %85 : vector<16x8xf32> to vector<2x8x8xf32>
    %c1_54 = arith.constant 1 : index
    %c0_55 = arith.constant 0 : index
    %c0_56 = arith.constant 0 : index
    %87 = vector.load %arg8[%c1_54, %c0_55, %c0_56] : memref<4x32x8xf32, #tpu.memory_space<vmem>>, vector<1x32x8xf32>
    %88 = vector.shape_cast %87 : vector<1x32x8xf32> to vector<32x8xf32>
    %cst_57 = arith.constant dense<0.000000e+00> : vector<16x8xf32>
    %89 = tpu.matmul %24, %88, %cst_57 {dimension_numbers = #tpu.dot_dimension_numbers<[1], [0], [0], [1], [0, 0, 1, 1], [], []>} : vector<16x32xf32>, vector<32x8xf32>, vector<16x8xf32> -> vector<16x8xf32>
    %c1_58 = arith.constant 1 : index
    %c0_59 = arith.constant 0 : index
    %c0_60 = arith.constant 0 : index
    %90 = vector.load %arg9[%c1_58, %c0_59, %c0_60] : memref<4x1x8xf32, #tpu.memory_space<vmem>>, vector<1x1x8xf32>
    %91 = vector.shape_cast %90 : vector<1x1x8xf32> to vector<1x8xf32>
    %92 = vector.broadcast %91 : vector<1x8xf32> to vector<16x8xf32>
    %93 = arith.addf %89, %92 : vector<16x8xf32>
    %94 = vector.shape_cast %93 : vector<16x8xf32> to vector<2x8x8xf32>
    "tpu.trace_start"() <{level = 10 : i32, message = "bqd,bkd->bqk"}> : () -> ()
    %cst_61 = arith.constant dense<0.000000e+00> : vector<2x8x8xf32>
    %95 = tpu.matmul %78, %86, %cst_61 {dimension_numbers = #tpu.dot_dimension_numbers<[2], [2], [1], [1], [0, 0, 0, 1, 1, 1], [0], [0]>} : vector<2x8x8xf32>, vector<2x8x8xf32>, vector<2x8x8xf32> -> vector<2x8x8xf32>
    "tpu.trace_stop"() : () -> ()
    %96 = vector.broadcast %26 : vector<1x8x8xf32> to vector<2x8x8xf32>
    %97 = arith.addf %95, %96 : vector<2x8x8xf32>
    %cst_62 = arith.constant dense<0xFF800000> : vector<2x8xf32>
    %98 = vector.multi_reduction <maximumf>, %97, %cst_62 [2] : vector<2x8x8xf32> to vector<2x8xf32>
    %99 = vector.shape_cast %98 : vector<2x8xf32> to vector<2x8x1xf32>
    %100 = vector.broadcast %99 : vector<2x8x1xf32> to vector<2x8x8xf32>
    %101 = arith.subf %97, %100 : vector<2x8x8xf32>
    %102 = math.exp %101 : vector<2x8x8xf32>
    %cst_63 = arith.constant dense<0.000000e+00> : vector<2x8xf32>
    %103 = vector.multi_reduction <add>, %102, %cst_63 [2] : vector<2x8x8xf32> to vector<2x8xf32>
    %104 = vector.shape_cast %103 : vector<2x8xf32> to vector<2x8x1xf32>
    %105 = tpu.reciprocal %104 {approx = true} : vector<2x8x1xf32> -> vector<2x8x1xf32>
    %106 = vector.broadcast %105 : vector<2x8x1xf32> to vector<2x8x8xf32>
    %107 = arith.mulf %102, %106 : vector<2x8x8xf32>
    "tpu.trace_start"() <{level = 10 : i32, message = "bqk,bkd->bqd"}> : () -> ()
    %cst_64 = arith.constant dense<0.000000e+00> : vector<2x8x8xf32>
    %108 = tpu.matmul %107, %94, %cst_64 {dimension_numbers = #tpu.dot_dimension_numbers<[2], [1], [1], [2], [0, 0, 0, 1, 1, 2], [0], [0]>} : vector<2x8x8xf32>, vector<2x8x8xf32>, vector<2x8x8xf32> -> vector<2x8x8xf32>
    "tpu.trace_stop"() : () -> ()
    %109 = vector.shape_cast %108 : vector<2x8x8xf32> to vector<16x8xf32>
    %c1_65 = arith.constant 1 : index
    %c0_66 = arith.constant 0 : index
    %c0_67 = arith.constant 0 : index
    %110 = vector.load %arg10[%c1_65, %c0_66, %c0_67] : memref<4x8x32xf32, #tpu.memory_space<vmem>>, vector<1x8x32xf32>
    %111 = vector.shape_cast %110 : vector<1x8x32xf32> to vector<8x32xf32>
    %cst_68 = arith.constant dense<0.000000e+00> : vector<16x32xf32>
    %112 = tpu.matmul %109, %111, %cst_68 {dimension_numbers = #tpu.dot_dimension_numbers<[1], [0], [0], [1], [0, 0, 1, 1], [], []>} : vector<16x8xf32>, vector<8x32xf32>, vector<16x32xf32> -> vector<16x32xf32>
    %113 = arith.addf %70, %112 : vector<16x32xf32>
    %c2 = arith.constant 2 : index
    %c0_69 = arith.constant 0 : index
    %c0_70 = arith.constant 0 : index
    %114 = vector.load %arg4[%c2, %c0_69, %c0_70] : memref<4x32x8xf32, #tpu.memory_space<vmem>>, vector<1x32x8xf32>
    %115 = vector.shape_cast %114 : vector<1x32x8xf32> to vector<32x8xf32>
    %cst_71 = arith.constant dense<0.000000e+00> : vector<16x8xf32>
    %116 = tpu.matmul %24, %115, %cst_71 {dimension_numbers = #tpu.dot_dimension_numbers<[1], [0], [0], [1], [0, 0, 1, 1], [], []>} : vector<16x32xf32>, vector<32x8xf32>, vector<16x8xf32> -> vector<16x8xf32>
    %c2_72 = arith.constant 2 : index
    %c0_73 = arith.constant 0 : index
    %c0_74 = arith.constant 0 : index
    %117 = vector.load %arg5[%c2_72, %c0_73, %c0_74] : memref<4x1x8xf32, #tpu.memory_space<vmem>>, vector<1x1x8xf32>
    %118 = vector.shape_cast %117 : vector<1x1x8xf32> to vector<1x8xf32>
    %119 = vector.broadcast %118 : vector<1x8xf32> to vector<16x8xf32>
    %120 = arith.addf %116, %119 : vector<16x8xf32>
    %121 = vector.shape_cast %120 : vector<16x8xf32> to vector<2x8x8xf32>
    %c2_75 = arith.constant 2 : index
    %c0_76 = arith.constant 0 : index
    %c0_77 = arith.constant 0 : index
    %122 = vector.load %arg6[%c2_75, %c0_76, %c0_77] : memref<4x32x8xf32, #tpu.memory_space<vmem>>, vector<1x32x8xf32>
    %123 = vector.shape_cast %122 : vector<1x32x8xf32> to vector<32x8xf32>
    %cst_78 = arith.constant dense<0.000000e+00> : vector<16x8xf32>
    %124 = tpu.matmul %24, %123, %cst_78 {dimension_numbers = #tpu.dot_dimension_numbers<[1], [0], [0], [1], [0, 0, 1, 1], [], []>} : vector<16x32xf32>, vector<32x8xf32>, vector<16x8xf32> -> vector<16x8xf32>
    %c2_79 = arith.constant 2 : index
    %c0_80 = arith.constant 0 : index
    %c0_81 = arith.constant 0 : index
    %125 = vector.load %arg7[%c2_79, %c0_80, %c0_81] : memref<4x1x8xf32, #tpu.memory_space<vmem>>, vector<1x1x8xf32>
    %126 = vector.shape_cast %125 : vector<1x1x8xf32> to vector<1x8xf32>
    %127 = vector.broadcast %126 : vector<1x8xf32> to vector<16x8xf32>
    %128 = arith.addf %124, %127 : vector<16x8xf32>
    %129 = vector.shape_cast %128 : vector<16x8xf32> to vector<2x8x8xf32>
    %c2_82 = arith.constant 2 : index
    %c0_83 = arith.constant 0 : index
    %c0_84 = arith.constant 0 : index
    %130 = vector.load %arg8[%c2_82, %c0_83, %c0_84] : memref<4x32x8xf32, #tpu.memory_space<vmem>>, vector<1x32x8xf32>
    %131 = vector.shape_cast %130 : vector<1x32x8xf32> to vector<32x8xf32>
    %cst_85 = arith.constant dense<0.000000e+00> : vector<16x8xf32>
    %132 = tpu.matmul %24, %131, %cst_85 {dimension_numbers = #tpu.dot_dimension_numbers<[1], [0], [0], [1], [0, 0, 1, 1], [], []>} : vector<16x32xf32>, vector<32x8xf32>, vector<16x8xf32> -> vector<16x8xf32>
    %c2_86 = arith.constant 2 : index
    %c0_87 = arith.constant 0 : index
    %c0_88 = arith.constant 0 : index
    %133 = vector.load %arg9[%c2_86, %c0_87, %c0_88] : memref<4x1x8xf32, #tpu.memory_space<vmem>>, vector<1x1x8xf32>
    %134 = vector.shape_cast %133 : vector<1x1x8xf32> to vector<1x8xf32>
    %135 = vector.broadcast %134 : vector<1x8xf32> to vector<16x8xf32>
    %136 = arith.addf %132, %135 : vector<16x8xf32>
    %137 = vector.shape_cast %136 : vector<16x8xf32> to vector<2x8x8xf32>
    "tpu.trace_start"() <{level = 10 : i32, message = "bqd,bkd->bqk"}> : () -> ()
    %cst_89 = arith.constant dense<0.000000e+00> : vector<2x8x8xf32>
    %138 = tpu.matmul %121, %129, %cst_89 {dimension_numbers = #tpu.dot_dimension_numbers<[2], [2], [1], [1], [0, 0, 0, 1, 1, 1], [0], [0]>} : vector<2x8x8xf32>, vector<2x8x8xf32>, vector<2x8x8xf32> -> vector<2x8x8xf32>
    "tpu.trace_stop"() : () -> ()
    %139 = vector.broadcast %26 : vector<1x8x8xf32> to vector<2x8x8xf32>
    %140 = arith.addf %138, %139 : vector<2x8x8xf32>
    %cst_90 = arith.constant dense<0xFF800000> : vector<2x8xf32>
    %141 = vector.multi_reduction <maximumf>, %140, %cst_90 [2] : vector<2x8x8xf32> to vector<2x8xf32>
    %142 = vector.shape_cast %141 : vector<2x8xf32> to vector<2x8x1xf32>
    %143 = vector.broadcast %142 : vector<2x8x1xf32> to vector<2x8x8xf32>
    %144 = arith.subf %140, %143 : vector<2x8x8xf32>
    %145 = math.exp %144 : vector<2x8x8xf32>
    %cst_91 = arith.constant dense<0.000000e+00> : vector<2x8xf32>
    %146 = vector.multi_reduction <add>, %145, %cst_91 [2] : vector<2x8x8xf32> to vector<2x8xf32>
    %147 = vector.shape_cast %146 : vector<2x8xf32> to vector<2x8x1xf32>
    %148 = tpu.reciprocal %147 {approx = true} : vector<2x8x1xf32> -> vector<2x8x1xf32>
    %149 = vector.broadcast %148 : vector<2x8x1xf32> to vector<2x8x8xf32>
    %150 = arith.mulf %145, %149 : vector<2x8x8xf32>
    "tpu.trace_start"() <{level = 10 : i32, message = "bqk,bkd->bqd"}> : () -> ()
    %cst_92 = arith.constant dense<0.000000e+00> : vector<2x8x8xf32>
    %151 = tpu.matmul %150, %137, %cst_92 {dimension_numbers = #tpu.dot_dimension_numbers<[2], [1], [1], [2], [0, 0, 0, 1, 1, 2], [0], [0]>} : vector<2x8x8xf32>, vector<2x8x8xf32>, vector<2x8x8xf32> -> vector<2x8x8xf32>
    "tpu.trace_stop"() : () -> ()
    %152 = vector.shape_cast %151 : vector<2x8x8xf32> to vector<16x8xf32>
    %c2_93 = arith.constant 2 : index
    %c0_94 = arith.constant 0 : index
    %c0_95 = arith.constant 0 : index
    %153 = vector.load %arg10[%c2_93, %c0_94, %c0_95] : memref<4x8x32xf32, #tpu.memory_space<vmem>>, vector<1x8x32xf32>
    %154 = vector.shape_cast %153 : vector<1x8x32xf32> to vector<8x32xf32>
    %cst_96 = arith.constant dense<0.000000e+00> : vector<16x32xf32>
    %155 = tpu.matmul %152, %154, %cst_96 {dimension_numbers = #tpu.dot_dimension_numbers<[1], [0], [0], [1], [0, 0, 1, 1], [], []>} : vector<16x8xf32>, vector<8x32xf32>, vector<16x32xf32> -> vector<16x32xf32>
    %156 = arith.addf %113, %155 : vector<16x32xf32>
    %c3 = arith.constant 3 : index
    %c0_97 = arith.constant 0 : index
    %c0_98 = arith.constant 0 : index
    %157 = vector.load %arg4[%c3, %c0_97, %c0_98] : memref<4x32x8xf32, #tpu.memory_space<vmem>>, vector<1x32x8xf32>
    %158 = vector.shape_cast %157 : vector<1x32x8xf32> to vector<32x8xf32>
    %cst_99 = arith.constant dense<0.000000e+00> : vector<16x8xf32>
    %159 = tpu.matmul %24, %158, %cst_99 {dimension_numbers = #tpu.dot_dimension_numbers<[1], [0], [0], [1], [0, 0, 1, 1], [], []>} : vector<16x32xf32>, vector<32x8xf32>, vector<16x8xf32> -> vector<16x8xf32>
    %c3_100 = arith.constant 3 : index
    %c0_101 = arith.constant 0 : index
    %c0_102 = arith.constant 0 : index
    %160 = vector.load %arg5[%c3_100, %c0_101, %c0_102] : memref<4x1x8xf32, #tpu.memory_space<vmem>>, vector<1x1x8xf32>
    %161 = vector.shape_cast %160 : vector<1x1x8xf32> to vector<1x8xf32>
    %162 = vector.broadcast %161 : vector<1x8xf32> to vector<16x8xf32>
    %163 = arith.addf %159, %162 : vector<16x8xf32>
    %164 = vector.shape_cast %163 : vector<16x8xf32> to vector<2x8x8xf32>
    %c3_103 = arith.constant 3 : index
    %c0_104 = arith.constant 0 : index
    %c0_105 = arith.constant 0 : index
    %165 = vector.load %arg6[%c3_103, %c0_104, %c0_105] : memref<4x32x8xf32, #tpu.memory_space<vmem>>, vector<1x32x8xf32>
    %166 = vector.shape_cast %165 : vector<1x32x8xf32> to vector<32x8xf32>
    %cst_106 = arith.constant dense<0.000000e+00> : vector<16x8xf32>
    %167 = tpu.matmul %24, %166, %cst_106 {dimension_numbers = #tpu.dot_dimension_numbers<[1], [0], [0], [1], [0, 0, 1, 1], [], []>} : vector<16x32xf32>, vector<32x8xf32>, vector<16x8xf32> -> vector<16x8xf32>
    %c3_107 = arith.constant 3 : index
    %c0_108 = arith.constant 0 : index
    %c0_109 = arith.constant 0 : index
    %168 = vector.load %arg7[%c3_107, %c0_108, %c0_109] : memref<4x1x8xf32, #tpu.memory_space<vmem>>, vector<1x1x8xf32>
    %169 = vector.shape_cast %168 : vector<1x1x8xf32> to vector<1x8xf32>
    %170 = vector.broadcast %169 : vector<1x8xf32> to vector<16x8xf32>
    %171 = arith.addf %167, %170 : vector<16x8xf32>
    %172 = vector.shape_cast %171 : vector<16x8xf32> to vector<2x8x8xf32>
    %c3_110 = arith.constant 3 : index
    %c0_111 = arith.constant 0 : index
    %c0_112 = arith.constant 0 : index
    %173 = vector.load %arg8[%c3_110, %c0_111, %c0_112] : memref<4x32x8xf32, #tpu.memory_space<vmem>>, vector<1x32x8xf32>
    %174 = vector.shape_cast %173 : vector<1x32x8xf32> to vector<32x8xf32>
    %cst_113 = arith.constant dense<0.000000e+00> : vector<16x8xf32>
    %175 = tpu.matmul %24, %174, %cst_113 {dimension_numbers = #tpu.dot_dimension_numbers<[1], [0], [0], [1], [0, 0, 1, 1], [], []>} : vector<16x32xf32>, vector<32x8xf32>, vector<16x8xf32> -> vector<16x8xf32>
    %c3_114 = arith.constant 3 : index
    %c0_115 = arith.constant 0 : index
    %c0_116 = arith.constant 0 : index
    %176 = vector.load %arg9[%c3_114, %c0_115, %c0_116] : memref<4x1x8xf32, #tpu.memory_space<vmem>>, vector<1x1x8xf32>
    %177 = vector.shape_cast %176 : vector<1x1x8xf32> to vector<1x8xf32>
    %178 = vector.broadcast %177 : vector<1x8xf32> to vector<16x8xf32>
    %179 = arith.addf %175, %178 : vector<16x8xf32>
    %180 = vector.shape_cast %179 : vector<16x8xf32> to vector<2x8x8xf32>
    "tpu.trace_start"() <{level = 10 : i32, message = "bqd,bkd->bqk"}> : () -> ()
    %cst_117 = arith.constant dense<0.000000e+00> : vector<2x8x8xf32>
    %181 = tpu.matmul %164, %172, %cst_117 {dimension_numbers = #tpu.dot_dimension_numbers<[2], [2], [1], [1], [0, 0, 0, 1, 1, 1], [0], [0]>} : vector<2x8x8xf32>, vector<2x8x8xf32>, vector<2x8x8xf32> -> vector<2x8x8xf32>
    "tpu.trace_stop"() : () -> ()
    %182 = vector.broadcast %26 : vector<1x8x8xf32> to vector<2x8x8xf32>
    %183 = arith.addf %181, %182 : vector<2x8x8xf32>
    %cst_118 = arith.constant dense<0xFF800000> : vector<2x8xf32>
    %184 = vector.multi_reduction <maximumf>, %183, %cst_118 [2] : vector<2x8x8xf32> to vector<2x8xf32>
    %185 = vector.shape_cast %184 : vector<2x8xf32> to vector<2x8x1xf32>
    %186 = vector.broadcast %185 : vector<2x8x1xf32> to vector<2x8x8xf32>
    %187 = arith.subf %183, %186 : vector<2x8x8xf32>
    %188 = math.exp %187 : vector<2x8x8xf32>
    %cst_119 = arith.constant dense<0.000000e+00> : vector<2x8xf32>
    %189 = vector.multi_reduction <add>, %188, %cst_119 [2] : vector<2x8x8xf32> to vector<2x8xf32>
    %190 = vector.shape_cast %189 : vector<2x8xf32> to vector<2x8x1xf32>
    %191 = tpu.reciprocal %190 {approx = true} : vector<2x8x1xf32> -> vector<2x8x1xf32>
    %192 = vector.broadcast %191 : vector<2x8x1xf32> to vector<2x8x8xf32>
    %193 = arith.mulf %188, %192 : vector<2x8x8xf32>
    "tpu.trace_start"() <{level = 10 : i32, message = "bqk,bkd->bqd"}> : () -> ()
    %cst_120 = arith.constant dense<0.000000e+00> : vector<2x8x8xf32>
    %194 = tpu.matmul %193, %180, %cst_120 {dimension_numbers = #tpu.dot_dimension_numbers<[2], [1], [1], [2], [0, 0, 0, 1, 1, 2], [0], [0]>} : vector<2x8x8xf32>, vector<2x8x8xf32>, vector<2x8x8xf32> -> vector<2x8x8xf32>
    "tpu.trace_stop"() : () -> ()
    %195 = vector.shape_cast %194 : vector<2x8x8xf32> to vector<16x8xf32>
    %c3_121 = arith.constant 3 : index
    %c0_122 = arith.constant 0 : index
    %c0_123 = arith.constant 0 : index
    %196 = vector.load %arg10[%c3_121, %c0_122, %c0_123] : memref<4x8x32xf32, #tpu.memory_space<vmem>>, vector<1x8x32xf32>
    %197 = vector.shape_cast %196 : vector<1x8x32xf32> to vector<8x32xf32>
    %cst_124 = arith.constant dense<0.000000e+00> : vector<16x32xf32>
    %198 = tpu.matmul %195, %197, %cst_124 {dimension_numbers = #tpu.dot_dimension_numbers<[1], [0], [0], [1], [0, 0, 1, 1], [], []>} : vector<16x8xf32>, vector<8x32xf32>, vector<16x32xf32> -> vector<16x32xf32>
    %199 = arith.addf %156, %198 : vector<16x32xf32>
    %200 = arith.addf %0, %199 : vector<16x32xf32>
    %c0_125 = arith.constant 0 : index
    %c0_126 = arith.constant 0 : index
    %201 = vector.load %arg11[%c0_125, %c0_126] : memref<1x32xf32, #tpu.memory_space<vmem>>, vector<1x32xf32>
    %202 = vector.broadcast %201 : vector<1x32xf32> to vector<16x32xf32>
    %203 = arith.addf %200, %202 : vector<16x32xf32>
    %c0_127 = arith.constant 0 : index
    %c0_128 = arith.constant 0 : index
    %204 = vector.load %arg12[%c0_127, %c0_128] : memref<1x32xf32, #tpu.memory_space<vmem>>, vector<1x32xf32>
    %c0_129 = arith.constant 0 : index
    %c0_130 = arith.constant 0 : index
    %205 = vector.load %arg13[%c0_129, %c0_130] : memref<1x32xf32, #tpu.memory_space<vmem>>, vector<1x32xf32>
    %cst_131 = arith.constant dense<0.000000e+00> : vector<16xf32>
    %206 = vector.multi_reduction <add>, %203, %cst_131 [1] : vector<16x32xf32> to vector<16xf32>
    %207 = vector.shape_cast %206 : vector<16xf32> to vector<16x1xf32>
    %cst_132 = arith.constant 3.200000e+01 : f32
    %208 = vector.broadcast %cst_132 : f32 to vector<16x1xf32>
    %209 = arith.divf %207, %208 : vector<16x1xf32>
    %210 = vector.broadcast %209 : vector<16x1xf32> to vector<16x32xf32>
    %211 = arith.subf %203, %210 : vector<16x32xf32>
    %212 = arith.mulf %211, %211 : vector<16x32xf32>
    %cst_133 = arith.constant dense<0.000000e+00> : vector<16xf32>
    %213 = vector.multi_reduction <add>, %212, %cst_133 [1] : vector<16x32xf32> to vector<16xf32>
    %214 = vector.shape_cast %213 : vector<16xf32> to vector<16x1xf32>
    %cst_134 = arith.constant 3.200000e+01 : f32
    %215 = vector.broadcast %cst_134 : f32 to vector<16x1xf32>
    %216 = arith.divf %214, %215 : vector<16x1xf32>
    %217 = vector.broadcast %209 : vector<16x1xf32> to vector<16x32xf32>
    %218 = arith.subf %203, %217 : vector<16x32xf32>
    %cst_135 = arith.constant 9.99999974E-6 : f32
    %219 = vector.broadcast %cst_135 : f32 to vector<16x1xf32>
    %220 = arith.addf %216, %219 : vector<16x1xf32>
    %221 = math.rsqrt %220 : vector<16x1xf32>
    %222 = vector.broadcast %221 : vector<16x1xf32> to vector<16x32xf32>
    %223 = arith.mulf %218, %222 : vector<16x32xf32>
    %224 = vector.broadcast %204 : vector<1x32xf32> to vector<16x32xf32>
    %225 = arith.mulf %223, %224 : vector<16x32xf32>
    %226 = vector.broadcast %205 : vector<1x32xf32> to vector<16x32xf32>
    %227 = arith.addf %225, %226 : vector<16x32xf32>
    %c0_136 = arith.constant 0 : index
    %c0_137 = arith.constant 0 : index
    %228 = vector.load %arg14[%c0_136, %c0_137] : memref<32x128xf32, #tpu.memory_space<vmem>>, vector<32x128xf32>
    %cst_138 = arith.constant dense<0.000000e+00> : vector<16x128xf32>
    %229 = tpu.matmul %227, %228, %cst_138 {dimension_numbers = #tpu.dot_dimension_numbers<[1], [0], [0], [1], [0, 0, 1, 1], [], []>} : vector<16x32xf32>, vector<32x128xf32>, vector<16x128xf32> -> vector<16x128xf32>
    %c0_139 = arith.constant 0 : index
    %c0_140 = arith.constant 0 : index
    %230 = vector.load %arg15[%c0_139, %c0_140] : memref<1x128xf32, #tpu.memory_space<vmem>>, vector<1x128xf32>
    %231 = vector.broadcast %230 : vector<1x128xf32> to vector<16x128xf32>
    %232 = arith.addf %229, %231 : vector<16x128xf32>
    %cst_141 = arith.constant 1.702000e+00 : f32
    %233 = vector.broadcast %cst_141 : f32 to vector<16x128xf32>
    %234 = arith.mulf %233, %232 : vector<16x128xf32>
    %235 = arith.negf %234 : vector<16x128xf32>
    %236 = math.exp %235 : vector<16x128xf32>
    %cst_142 = arith.constant 1.000000e+00 : f32
    %237 = vector.broadcast %cst_142 : f32 to vector<16x128xf32>
    %238 = arith.addf %237, %236 : vector<16x128xf32>
    %239 = arith.divf %237, %238 : vector<16x128xf32>
    %240 = arith.mulf %232, %239 : vector<16x128xf32>
    %c0_143 = arith.constant 0 : index
    %c0_144 = arith.constant 0 : index
    %241 = vector.load %arg16[%c0_143, %c0_144] : memref<128x32xf32, #tpu.memory_space<vmem>>, vector<128x32xf32>
    %cst_145 = arith.constant dense<0.000000e+00> : vector<16x32xf32>
    %242 = tpu.matmul %240, %241, %cst_145 {dimension_numbers = #tpu.dot_dimension_numbers<[1], [0], [0], [1], [0, 0, 1, 1], [], []>} : vector<16x128xf32>, vector<128x32xf32>, vector<16x32xf32> -> vector<16x32xf32>
    %c0_146 = arith.constant 0 : index
    %c0_147 = arith.constant 0 : index
    %243 = vector.load %arg17[%c0_146, %c0_147] : memref<1x32xf32, #tpu.memory_space<vmem>>, vector<1x32xf32>
    %244 = vector.broadcast %243 : vector<1x32xf32> to vector<16x32xf32>
    %245 = arith.addf %242, %244 : vector<16x32xf32>
    %246 = arith.addf %203, %245 : vector<16x32xf32>
    %c0_148 = arith.constant 0 : index
    %c0_149 = arith.constant 0 : index
    %247 = vector.load %arg18[%c0_148, %c0_149] : memref<16x32xf32, #tpu.memory_space<vmem>>, vector<16x32xf32>
    tpu.vector_store %arg18[%c0_148, %c0_149], %246 {strides = array<i32>} : memref<16x32xf32, #tpu.memory_space<vmem>>, vector<16x32xf32>,
    return
  }
}

</mosaic_0001>

<llo_original>
// kernel: tpu_custom_call.1
$region0: #{tpu_custom_call.1}
  #allocation0 [shape = 'u32[]', space=smem, size = 0x4, offset = 0x4, fixed_abs, tag = 'smem constant byte address 0x4 - core index']
  #allocation1 [shape = 'u32[72,128]{1,0:T(1,128)}', space=vmem, size = 0x9000, scoped, tag = 'internal scratch']
  %s0 = inlined_call_operand.vmem [shape: f32[16,32], index: 0, kind: input, shape index: {}]
  %s1 = inlined_call_operand.vmem [shape: f32[8,8], index: 1, kind: input, shape index: {}]
  %s2 = inlined_call_operand.vmem [shape: f32[1,32], index: 2, kind: input, shape index: {}]
  %s3 = inlined_call_operand.vmem [shape: f32[1,32], index: 3, kind: input, shape index: {}]
  %s4 = inlined_call_operand.vmem [shape: f32[4,32,8], index: 4, kind: input, shape index: {}]
  %s5 = inlined_call_operand.vmem [shape: f32[4,1,8], index: 5, kind: input, shape index: {}]
  %s6 = inlined_call_operand.vmem [shape: f32[4,32,8], index: 6, kind: input, shape index: {}]
  %s7 = inlined_call_operand.vmem [shape: f32[4,1,8], index: 7, kind: input, shape index: {}]
  %s8 = inlined_call_operand.vmem [shape: f32[4,32,8], index: 8, kind: input, shape index: {}]
  %s9 = inlined_call_operand.vmem [shape: f32[4,1,8], index: 9, kind: input, shape index: {}]
  %s10 = inlined_call_operand.vmem [shape: f32[4,8,32], index: 10, kind: input, shape index: {}]
  %s11 = inlined_call_operand.vmem [shape: f32[1,32], index: 11, kind: input, shape index: {}]
  %s12 = inlined_call_operand.vmem [shape: f32[1,32], index: 12, kind: input, shape index: {}]
  %s13 = inlined_call_operand.vmem [shape: f32[1,32], index: 13, kind: input, shape index: {}]
  %s14 = inlined_call_operand.vmem [shape: f32[32,128], index: 14, kind: input, shape index: {}]
  %s15 = inlined_call_operand.vmem [shape: f32[1,128], index: 15, kind: input, shape index: {}]
  %s16 = inlined_call_operand.vmem [shape: f32[128,32], index: 16, kind: input, shape index: {}]
  %s17 = inlined_call_operand.vmem [shape: f32[1,32], index: 17, kind: input, shape index: {}]
  %s18 = inlined_call_operand.hbm [shape: f32[16,32], index: 18, kind: output, shape index: {}]
  %s19 = sld [smem:[#allocation0]]
  $region82: #{tpu_custom_call.1} parent=0
    _
  %s21 = ssub.s32 1, %s19
  %s22 = scalar_select 0, %s21, %s19
  $region1: #{tpu_custom_call.1} parent=0
    #allocation2 [shape = 'u8[8192]{0}', space=vmem, size = 0x2000, scoped, tag = 'output window, operand 0, single buffered']
    #allocation3 [shape = 's32[1]{0}', space=sflag, size = 0x4, scoped, tag = 'scoped memory for tpu_custom_call.1']
    %23 = vsyncpa [#allocation3], 0
    // Predicated region
    $region2: #{tpu_custom_call.1} parent=1 // pred_check
      _
    $region3: #{tpu_custom_call.1} parent=1 // pred_check_branch
      %25 = sbr.rel (0) target = $region5
    $region4: #{tpu_custom_call.1} parent=1 // pred_region
      _
    $region5: #{tpu_custom_call.1} parent=1 // pred_fallthru
      _
    // Predicated region
    $region6: #{tpu_custom_call.1} parent=1 // pred_check
      _
    $region7: #{tpu_custom_call.1} parent=1 // pred_check_branch
      %27 = sbr.rel (0) target = $region9
    $region8: #{tpu_custom_call.1} parent=1 // pred_region
      _
    $region9: #{tpu_custom_call.1} parent=1 // pred_fallthru
      _
    // Predicated region
    $region10: #{tpu_custom_call.1} parent=1 // pred_check
      _
    $region11: #{tpu_custom_call.1} parent=1 // pred_check_branch
      %29 = sbr.rel (0) target = $region13
    $region12: #{tpu_custom_call.1} parent=1 // pred_region
      _
    $region13: #{tpu_custom_call.1} parent=1 // pred_fallthru
      _
    // Predicated region
    $region14: #{tpu_custom_call.1} parent=1 // pred_check
      _
    $region15: #{tpu_custom_call.1} parent=1 // pred_check_branch
      %31 = sbr.rel (0) target = $region17
    $region16: #{tpu_custom_call.1} parent=1 // pred_region
      _
    $region17: #{tpu_custom_call.1} parent=1 // pred_fallthru
      _
    // Predicated region
    $region18: #{tpu_custom_call.1} parent=1 // pred_check
      _
    $region19: #{tpu_custom_call.1} parent=1 // pred_check_branch
      %33 = sbr.rel (0) target = $region21
    $region20: #{tpu_custom_call.1} parent=1 // pred_region
      _
    $region21: #{tpu_custom_call.1} parent=1 // pred_fallthru
      _
    // Predicated region
    $region22: #{tpu_custom_call.1} parent=1 // pred_check
      _
    $region23: #{tpu_custom_call.1} parent=1 // pred_check_branch
      %35 = sbr.rel (0) target = $region25
    $region24: #{tpu_custom_call.1} parent=1 // pred_region
      _
    $region25: #{tpu_custom_call.1} parent=1 // pred_fallthru
      _
    // Predicated region
    $region26: #{tpu_custom_call.1} parent=1 // pred_check
      _
    $region27: #{tpu_custom_call.1} parent=1 // pred_check_branch
      %37 = sbr.rel (0) target = $region29
    $region28: #{tpu_custom_call.1} parent=1 // pred_region
      _
    $region29: #{tpu_custom_call.1} parent=1 // pred_fallthru
      _
    // Predicated region
    $region30: #{tpu_custom_call.1} parent=1 // pred_check
      _
    $region31: #{tpu_custom_call.1} parent=1 // pred_check_branch
      %39 = sbr.rel (0) target = $region33
    $region32: #{tpu_custom_call.1} parent=1 // pred_region
      _
    $region33: #{tpu_custom_call.1} parent=1 // pred_fallthru
      _
    // Predicated region
    $region34: #{tpu_custom_call.1} parent=1 // pred_check
      _
    $region35: #{tpu_custom_call.1} parent=1 // pred_check_branch
      %41 = sbr.rel (0) target = $region37
    $region36: #{tpu_custom_call.1} parent=1 // pred_region
      _
    $region37: #{tpu_custom_call.1} parent=1 // pred_fallthru
      _
    // Predicated region
    $region38: #{tpu_custom_call.1} parent=1 // pred_check
      _
    $region39: #{tpu_custom_call.1} parent=1 // pred_check_branch
      %43 = sbr.rel (0) target = $region41
    $region40: #{tpu_custom_call.1} parent=1 // pred_region
      _
    $region41: #{tpu_custom_call.1} parent=1 // pred_fallthru
      _
    // Predicated region
    $region42: #{tpu_custom_call.1} parent=1 // pred_check
      _
    $region43: #{tpu_custom_call.1} parent=1 // pred_check_branch
      %45 = sbr.rel (0) target = $region45
    $region44: #{tpu_custom_call.1} parent=1 // pred_region
      _
    $region45: #{tpu_custom_call.1} parent=1 // pred_fallthru
      _
    // Predicated region
    $region46: #{tpu_custom_call.1} parent=1 // pred_check
      _
    $region47: #{tpu_custom_call.1} parent=1 // pred_check_branch
      %47 = sbr.rel (0) target = $region49
    $region48: #{tpu_custom_call.1} parent=1 // pred_region
      _
    $region49: #{tpu_custom_call.1} parent=1 // pred_fallthru
      _
    // Predicated region
    $region50: #{tpu_custom_call.1} parent=1 // pred_check
      _
    $region51: #{tpu_custom_call.1} parent=1 // pred_check_branch
      %49 = sbr.rel (0) target = $region53
    $region52: #{tpu_custom_call.1} parent=1 // pred_region
      _
    $region53: #{tpu_custom_call.1} parent=1 // pred_fallthru
      _
    // Predicated region
    $region54: #{tpu_custom_call.1} parent=1 // pred_check
      _
    $region55: #{tpu_custom_call.1} parent=1 // pred_check_branch
      %51 = sbr.rel (0) target = $region57
    $region56: #{tpu_custom_call.1} parent=1 // pred_region
      _
    $region57: #{tpu_custom_call.1} parent=1 // pred_fallthru
      _
    // Predicated region
    $region58: #{tpu_custom_call.1} parent=1 // pred_check
      _
    $region59: #{tpu_custom_call.1} parent=1 // pred_check_branch
      %53 = sbr.rel (0) target = $region61
    $region60: #{tpu_custom_call.1} parent=1 // pred_region
      _
    $region61: #{tpu_custom_call.1} parent=1 // pred_fallthru
      _
    // Predicated region
    $region62: #{tpu_custom_call.1} parent=1 // pred_check
      _
    $region63: #{tpu_custom_call.1} parent=1 // pred_check_branch
      %55 = sbr.rel (0) target = $region65
    $region64: #{tpu_custom_call.1} parent=1 // pred_region
      _
    $region65: #{tpu_custom_call.1} parent=1 // pred_fallthru
      _
    // Predicated region
    $region66: #{tpu_custom_call.1} parent=1 // pred_check
      _
    $region67: #{tpu_custom_call.1} parent=1 // pred_check_branch
      %57 = sbr.rel (0) target = $region69
    $region68: #{tpu_custom_call.1} parent=1 // pred_region
      _
    $region69: #{tpu_custom_call.1} parent=1 // pred_fallthru
      _
    // Predicated region
    $region70: #{tpu_custom_call.1} parent=1 // pred_check
      _
    $region71: #{tpu_custom_call.1} parent=1 // pred_check_branch
      %59 = sbr.rel (0) target = $region73
    $region72: #{tpu_custom_call.1} parent=1 // pred_region
      _
    $region73: #{tpu_custom_call.1} parent=1 // pred_fallthru
      _
    %v60 = vld [vmem:[%s0] sm:$0xff]
    %v61 = vld [vmem:[%s0 + $0x8] sm:$0xff]
    %v62 = vld [vmem:[%s2] sm:$0x1]
    %v63 = vld [vmem:[%s3] sm:$0x1]
    %vm64 = vcmask 261120
    %v65 = vsel %vm64, %v60, 0.0
    %66 = vadd.xlane.f32.xlu0 %v65
    %v67 = vpop.xlane.xlu0 %66
    %v68 = vsel %vm64, %v61, 0.0
    %69 = vadd.xlane.f32.xlu0 %v68
    %v70 = vpop.xlane.xlu0 %69
    %v71 = vrcp.pop 32.0
    %v72 = vmul.f32 32.0, %v71
    %v73 = vsub.f32 1.0, %v72
    %v74 = vmul.f32 %v71, %v73
    %v75 = vadd.f32 %v71, %v74
    %vm76 = vweird.f32 %v71
    %v77 = vsel %vm76, %v71, %v75
    %v78 = vmul.f32 %v67, %v77
    %v79 = vmul.f32 %v70, %v77
    %v80 = vsub.f32 %v60, %v78
    %v81 = vsub.f32 %v61, %v79
    %v82 = vmul.f32 %v80, %v80
    %v83 = vmul.f32 %v81, %v81
    %v84 = vsel %vm64, %v82, 0.0
    %85 = vadd.xlane.f32.xlu0 %v84
    %v86 = vpop.xlane.xlu0 %85
    %v87 = vsel %vm64, %v83, 0.0
    %88 = vadd.xlane.f32.xlu0 %v87
    %v89 = vpop.xlane.xlu0 %88
    %v90 = vmul.f32 %v86, %v77
    %v91 = vmul.f32 %v89, %v77
    %v92 = vadd.f32 %v90, 1e-05
    %v93 = vadd.f32 %v91, 1e-05
    %v94 = vrsqrt.pop %v92
    %v95 = vmul.f32 %v94, %v92
    %v96 = vmul.f32 %v95, %v94
    %v97 = vmul.f32 0.5, %v96
    %v98 = vsub.f32 1.5, %v97
    %v99 = vmul.f32 %v94, %v98
    %vm100 = vweird.f32 %v92
    %vm101 = vweird.f32 %v94
    %vm102 = vmor %vm100, %vm101
    %v103 = vsel %vm102, %v94, %v99
    %v104 = vrsqrt.pop %v93
    %v105 = vmul.f32 %v104, %v93
    %v106 = vmul.f32 %v105, %v104
    %v107 = vmul.f32 0.5, %v106
    %v108 = vsub.f32 1.5, %v107
    %v109 = vmul.f32 %v104, %v108
    %vm110 = vweird.f32 %v93
    %vm111 = vweird.f32 %v104
    %vm112 = vmor %vm110, %vm111
    %v113 = vsel %vm112, %v104, %v109
    %v114 = vmul.f32 %v80, %v103
    %v115 = vmul.f32 %v81, %v113
    %v117 = vperm.slane %v62, 0
    %v119 = vmul.f32 %v114, %v117
    %v120 = vmul.f32 %v115, %v117
    %v122 = vperm.slane %v63, 0
    %v124 = vadd.f32 %v119, %v122
    %v125 = vadd.f32 %v120, %v122
    %v126 = vld [vmem:[%s1] sm:$0xff]
    %v127 = vld [vmem:[%s4] sm:$0xff]
    %v128 = vld [vmem:[%s4 + $0x8] sm:$0xff]
    %v129 = vld [vmem:[%s4 + $0x10] sm:$0xff]
    %v130 = vld [vmem:[%s4 + $0x18] sm:$0xff]
    %v131 = vld [vmem:[%s5] sm:$0x1]
    %v133 = vperm.slane %v131, 0
    %v136 = vsel %vm64, %v124, 0
    %v139 = vsel %vm64, %v125, 0
    %141 = vmatpush.msra.mxu0 0.0
    %142 = vmatpush.msra.mxu0 0.0
    %143 = vmatpush.msra.mxu0 0.0
    %144 = vmatpush.msra.mxu0 0.0
    %145 = vmatpush.msra.mxu0 0.0
    %146 = vmatpush.msra.mxu0 0.0
    %147 = vmatpush.msra.mxu0 0.0
    %148 = vmatpush.msra.mxu0 0.0
    %149 = vmatpush.msra.mxu0 0.0
    %150 = vmatpush.msra.mxu0 0.0
    %151 = vmatpush.msra.mxu0 0.0
    %152 = vmatpush.msra.mxu0 0.0
    %153 = vmatpush.msra.mxu0 %v130
    %154 = vmatpush.msra.mxu0 %v129
    %155 = vmatpush.msra.mxu0 %v128
    %156 = vmatpush.msra.mxu0 %v127
    %157 = vmatmul.f32.gmra.mxu0 %v136
    %v158 = vpop.f32.mrf.mxu0
    %v159 = vadd.f32 %v133, %v158
    %160 = vmatmul.f32.gmra.mxu0 %v139
    %v161 = vpop.f32.mrf.mxu0
    %v162 = vadd.f32 %v133, %v161
    %163 = vdwg.mxu0
    %v164 = vld [vmem:[%s6] sm:$0xff]
    %v165 = vld [vmem:[%s6 + $0x8] sm:$0xff]
    %v166 = vld [vmem:[%s6 + $0x10] sm:$0xff]
    %v167 = vld [vmem:[%s6 + $0x18] sm:$0xff]
    %v168 = vld [vmem:[%s7] sm:$0x1]
    %v170 = vperm.slane %v168, 0
    %172 = vmatpush.msra.mxu0 0.0
    %173 = vmatpush.msra.mxu0 0.0
    %174 = vmatpush.msra.mxu0 0.0
    %175 = vmatpush.msra.mxu0 0.0
    %176 = vmatpush.msra.mxu0 0.0
    %177 = vmatpush.msra.mxu0 0.0
    %178 = vmatpush.msra.mxu0 0.0
    %179 = vmatpush.msra.mxu0 0.0
    %180 = vmatpush.msra.mxu0 0.0
    %181 = vmatpush.msra.mxu0 0.0
    %182 = vmatpush.msra.mxu0 0.0
    %183 = vmatpush.msra.mxu0 0.0
    %184 = vmatpush.msra.mxu0 %v167
    %185 = vmatpush.msra.mxu0 %v166
    %186 = vmatpush.msra.mxu0 %v165
    %187 = vmatpush.msra.mxu0 %v164
    %188 = vmatmul.f32.gmra.mxu0 %v136
    %v189 = vpop.f32.mrf.mxu0
    %v190 = vadd.f32 %v170, %v189
    %191 = vmatmul.f32.gmra.mxu0 %v139
    %v192 = vpop.f32.mrf.mxu0
    %v193 = vadd.f32 %v170, %v192
    %194 = vdwg.mxu0
    %v195 = vld [vmem:[%s8] sm:$0xff]
    %v196 = vld [vmem:[%s8 + $0x8] sm:$0xff]
    %v197 = vld [vmem:[%s8 + $0x10] sm:$0xff]
    %v198 = vld [vmem:[%s8 + $0x18] sm:$0xff]
    %v199 = vld [vmem:[%s9] sm:$0x1]
    %v201 = vperm.slane %v199, 0
    %203 = vmatpush.msra.mxu0 0.0
    %204 = vmatpush.msra.mxu0 0.0
    %205 = vmatpush.msra.mxu0 0.0
    %206 = vmatpush.msra.mxu0 0.0
    %207 = vmatpush.msra.mxu0 0.0
    %208 = vmatpush.msra.mxu0 0.0
    %209 = vmatpush.msra.mxu0 0.0
    %210 = vmatpush.msra.mxu0 0.0
    %211 = vmatpush.msra.mxu0 0.0
    %212 = vmatpush.msra.mxu0 0.0
    %213 = vmatpush.msra.mxu0 0.0
    %214 = vmatpush.msra.mxu0 0.0
    %215 = vmatpush.msra.mxu0 %v198
    %216 = vmatpush.msra.mxu0 %v197
    %217 = vmatpush.msra.mxu0 %v196
    %218 = vmatpush.msra.mxu0 %v195
    %219 = vmatmul.f32.gmra.mxu0 %v136
    %v220 = vpop.f32.mrf.mxu0
    %v221 = vadd.f32 %v201, %v220
    %222 = vmatmul.f32.gmra.mxu0 %v139
    %v223 = vpop.f32.mrf.mxu0
    %v224 = vadd.f32 %v201, %v223
    %225 = vdwg.mxu0
    %vm226 = vcmask 64512
    %v228 = vsel %vm226, %v159, 0
    %v231 = vsel %vm226, %v190, 0
    %233 = vmatpush.xpose.msra.mxu0 0.0
    %234 = vmatpush.xpose.msra.mxu0 0.0
    %235 = vmatpush.xpose.msra.mxu0 0.0
    %236 = vmatpush.xpose.msra.mxu0 0.0
    %237 = vmatpush.xpose.msra.mxu0 0.0
    %238 = vmatpush.xpose.msra.mxu0 0.0
    %239 = vmatpush.xpose.msra.mxu0 0.0
    %240 = vmatpush.xpose.msra.mxu0 0.0
    %241 = vmatpush.xpose.msra.mxu0 0.0
    %242 = vmatpush.xpose.msra.mxu0 0.0
    %243 = vmatpush.xpose.msra.mxu0 0.0
    %244 = vmatpush.xpose.msra.mxu0 0.0
    %245 = vmatpush.xpose.msra.mxu0 0.0
    %246 = vmatpush.xpose.msra.mxu0 0.0
    %247 = vmatpush.xpose.msra.mxu0 0.0
    %248 = vmatpush.xpose.msra.mxu0 %v231
    %249 = vmatmul.f32.gmra.mxu0 %v228
    %v250 = vpop.f32.mrf.mxu0
    %v251 = vadd.f32 %v126, %v250
    %252 = vdwg.mxu0
    %v254 = vsel %vm226, %v162, 0
    %v257 = vsel %vm226, %v193, 0
    %259 = vmatpush.xpose.msra.mxu0 0.0
    %260 = vmatpush.xpose.msra.mxu0 0.0
    %261 = vmatpush.xpose.msra.mxu0 0.0
    %262 = vmatpush.xpose.msra.mxu0 0.0
    %263 = vmatpush.xpose.msra.mxu0 0.0
    %264 = vmatpush.xpose.msra.mxu0 0.0
    %265 = vmatpush.xpose.msra.mxu0 0.0
    %266 = vmatpush.xpose.msra.mxu0 0.0
    %267 = vmatpush.xpose.msra.mxu0 0.0
    %268 = vmatpush.xpose.msra.mxu0 0.0
    %269 = vmatpush.xpose.msra.mxu0 0.0
    %270 = vmatpush.xpose.msra.mxu0 0.0
    %271 = vmatpush.xpose.msra.mxu0 0.0
    %272 = vmatpush.xpose.msra.mxu0 0.0
    %273 = vmatpush.xpose.msra.mxu0 0.0
    %274 = vmatpush.xpose.msra.mxu0 %v257
    %275 = vmatmul.f32.gmra.mxu0 %v254
    %v276 = vpop.f32.mrf.mxu0
    %v277 = vadd.f32 %v126, %v276
    %278 = vdwg.mxu0
    %v279 = vsel %vm226, %v251, -inf
    %280 = vmax.xlane.f32.xlu0 %v279
    %v281 = vpop.xlane.xlu0 %280
    %v282 = vsel %vm226, %v277, -inf
    %283 = vmax.xlane.f32.xlu0 %v282
    %v284 = vpop.xlane.xlu0 %283
    %v285 = vsub.f32 %v251, %v281
    %v286 = vsub.f32 %v277, %v284
    %v287 = vmul.f32 %v285, 1.442695
    %v288 = vpow.pop %v287
    %v289 = vmul.f32 %v286, 1.442695
    %v290 = vpow.pop %v289
    %v291 = vsel %vm226, %v288, 0.0
    %292 = vadd.xlane.f32.xlu0 %v291
    %v293 = vpop.xlane.xlu0 %292
    %v294 = vsel %vm226, %v290, 0.0
    %295 = vadd.xlane.f32.xlu0 %v294
    %v296 = vpop.xlane.xlu0 %295
    %v297 = vrcp.pop %v293
    %v298 = vrcp.pop %v296
    %v299 = vmul.f32 %v288, %v297
    %v300 = vmul.f32 %v290, %v298
    %v302 = vsel %vm226, %v299, 0
    %304 = vmatpush.msra.mxu0 0.0
    %305 = vmatpush.msra.mxu0 0.0
    %306 = vmatpush.msra.mxu0 0.0
    %307 = vmatpush.msra.mxu0 0.0
    %308 = vmatpush.msra.mxu0 0.0
    %309 = vmatpush.msra.mxu0 0.0
    %310 = vmatpush.msra.mxu0 0.0
    %311 = vmatpush.msra.mxu0 0.0
    %312 = vmatpush.msra.mxu0 0.0
    %313 = vmatpush.msra.mxu0 0.0
    %314 = vmatpush.msra.mxu0 0.0
    %315 = vmatpush.msra.mxu0 0.0
    %316 = vmatpush.msra.mxu0 0.0
    %317 = vmatpush.msra.mxu0 0.0
    %318 = vmatpush.msra.mxu0 0.0
    %319 = vmatpush.msra.mxu0 %v221
    %320 = vmatmul.f32.gmra.mxu0 %v302
    %v321 = vpop.f32.mrf.mxu0
    %v322 = vadd.f32 0.0, %v321
    %323 = vdwg.mxu0
    %v325 = vsel %vm226, %v300, 0
    %327 = vmatpush.msra.mxu0 0.0
    %328 = vmatpush.msra.mxu0 0.0
    %329 = vmatpush.msra.mxu0 0.0
    %330 = vmatpush.msra.mxu0 0.0
    %331 = vmatpush.msra.mxu0 0.0
    %332 = vmatpush.msra.mxu0 0.0
    %333 = vmatpush.msra.mxu0 0.0
    %334 = vmatpush.msra.mxu0 0.0
    %335 = vmatpush.msra.mxu0 0.0
    %336 = vmatpush.msra.mxu0 0.0
    %337 = vmatpush.msra.mxu0 0.0
    %338 = vmatpush.msra.mxu0 0.0
    %339 = vmatpush.msra.mxu0 0.0
    %340 = vmatpush.msra.mxu0 0.0
    %341 = vmatpush.msra.mxu0 0.0
    %342 = vmatpush.msra.mxu0 %v224
    %343 = vmatmul.f32.gmra.mxu0 %v325
    %v344 = vpop.f32.mrf.mxu0
    %v345 = vadd.f32 0.0, %v344
    %346 = vdwg.mxu0
    %v347 = vld [vmem:[%s10] sm:$0xff]
    %s348 = scalar_lea.vmem %s4, 32
    %v349 = vld [vmem:[%s348] sm:$0xff]
    %v350 = vld [vmem:[%s348 + $0x8] sm:$0xff]
    %v351 = vld [vmem:[%s348 + $0x10] sm:$0xff]
    %v352 = vld [vmem:[%s348 + $0x18] sm:$0xff]
    %s353 = scalar_lea.vmem %s5, 1
    %v354 = vld [vmem:[%s353] sm:$0x1]
    %v356 = vperm.slane %v354, 0
    %358 = vmatpush.msra.mxu0 0.0
    %359 = vmatpush.msra.mxu0 0.0
    %360 = vmatpush.msra.mxu0 0.0
    %361 = vmatpush.msra.mxu0 0.0
    %362 = vmatpush.msra.mxu0 0.0
    %363 = vmatpush.msra.mxu0 0.0
    %364 = vmatpush.msra.mxu0 0.0
    %365 = vmatpush.msra.mxu0 0.0
    %366 = vmatpush.msra.mxu0 0.0
    %367 = vmatpush.msra.mxu0 0.0
    %368 = vmatpush.msra.mxu0 0.0
    %369 = vmatpush.msra.mxu0 0.0
    %370 = vmatpush.msra.mxu0 %v352
    %371 = vmatpush.msra.mxu0 %v351
    %372 = vmatpush.msra.mxu0 %v350
    %373 = vmatpush.msra.mxu0 %v349
    %374 = vmatmul.f32.gmra.mxu0 %v136
    %v375 = vpop.f32.mrf.mxu0
    %v376 = vadd.f32 %v356, %v375
    %377 = vmatmul.f32.gmra.mxu0 %v139
    %v378 = vpop.f32.mrf.mxu0
    %v379 = vadd.f32 %v356, %v378
    %380 = vdwg.mxu0
    %s381 = scalar_lea.vmem %s6, 32
    %v382 = vld [vmem:[%s381] sm:$0xff]
    %v383 = vld [vmem:[%s381 + $0x8] sm:$0xff]
    %v384 = vld [vmem:[%s381 + $0x10] sm:$0xff]
    %v385 = vld [vmem:[%s381 + $0x18] sm:$0xff]
    %s386 = scalar_lea.vmem %s7, 1
    %v387 = vld [vmem:[%s386] sm:$0x1]
    %v389 = vperm.slane %v387, 0
    %391 = vmatpush.msra.mxu0 0.0
    %392 = vmatpush.msra.mxu0 0.0
    %393 = vmatpush.msra.mxu0 0.0
    %394 = vmatpush.msra.mxu0 0.0
    %395 = vmatpush.msra.mxu0 0.0
    %396 = vmatpush.msra.mxu0 0.0
    %397 = vmatpush.msra.mxu0 0.0
    %398 = vmatpush.msra.mxu0 0.0
    %399 = vmatpush.msra.mxu0 0.0
    %400 = vmatpush.msra.mxu0 0.0
    %401 = vmatpush.msra.mxu0 0.0
    %402 = vmatpush.msra.mxu0 0.0
    %403 = vmatpush.msra.mxu0 %v385
    %404 = vmatpush.msra.mxu0 %v384
    %405 = vmatpush.msra.mxu0 %v383
    %406 = vmatpush.msra.mxu0 %v382
    %407 = vmatmul.f32.gmra.mxu0 %v136
    %v408 = vpop.f32.mrf.mxu0
    %v409 = vadd.f32 %v389, %v408
    %410 = vmatmul.f32.gmra.mxu0 %v139
    %v411 = vpop.f32.mrf.mxu0
    %v412 = vadd.f32 %v389, %v411
    %413 = vdwg.mxu0
    %s414 = scalar_lea.vmem %s8, 32
    %v415 = vld [vmem:[%s414] sm:$0xff]
    %v416 = vld [vmem:[%s414 + $0x8] sm:$0xff]
    %v417 = vld [vmem:[%s414 + $0x10] sm:$0xff]
    %v418 = vld [vmem:[%s414 + $0x18] sm:$0xff]
    %s419 = scalar_lea.vmem %s9, 1
    %v420 = vld [vmem:[%s419] sm:$0x1]
    %v422 = vperm.slane %v420, 0
    %424 = vmatpush.msra.mxu0 0.0
    %425 = vmatpush.msra.mxu0 0.0
    %426 = vmatpush.msra.mxu0 0.0
    %427 = vmatpush.msra.mxu0 0.0
    %428 = vmatpush.msra.mxu0 0.0
    %429 = vmatpush.msra.mxu0 0.0
    %430 = vmatpush.msra.mxu0 0.0
    %431 = vmatpush.msra.mxu0 0.0
    %432 = vmatpush.msra.mxu0 0.0
    %433 = vmatpush.msra.mxu0 0.0
    %434 = vmatpush.msra.mxu0 0.0
    %435 = vmatpush.msra.mxu0 0.0
    %436 = vmatpush.msra.mxu0 %v418
    %437 = vmatpush.msra.mxu0 %v417
    %438 = vmatpush.msra.mxu0 %v416
    %439 = vmatpush.msra.mxu0 %v415
    %440 = vmatmul.f32.gmra.mxu0 %v136
    %v441 = vpop.f32.mrf.mxu0
    %v442 = vadd.f32 %v422, %v441
    %443 = vmatmul.f32.gmra.mxu0 %v139
    %v444 = vpop.f32.mrf.mxu0
    %v445 = vadd.f32 %v422, %v444
    %446 = vdwg.mxu0
    %v448 = vsel %vm226, %v376, 0
    %v451 = vsel %vm226, %v409, 0
    %453 = vmatpush.xpose.msra.mxu0 0.0
    %454 = vmatpush.xpose.msra.mxu0 0.0
    %455 = vmatpush.xpose.msra.mxu0 0.0
    %456 = vmatpush.xpose.msra.mxu0 0.0
    %457 = vmatpush.xpose.msra.mxu0 0.0
    %458 = vmatpush.xpose.msra.mxu0 0.0
    %459 = vmatpush.xpose.msra.mxu0 0.0
    %460 = vmatpush.xpose.msra.mxu0 0.0
    %461 = vmatpush.xpose.msra.mxu0 0.0
    %462 = vmatpush.xpose.msra.mxu0 0.0
    %463 = vmatpush.xpose.msra.mxu0 0.0
    %464 = vmatpush.xpose.msra.mxu0 0.0
    %465 = vmatpush.xpose.msra.mxu0 0.0
    %466 = vmatpush.xpose.msra.mxu0 0.0
    %467 = vmatpush.xpose.msra.mxu0 0.0
    %468 = vmatpush.xpose.msra.mxu0 %v451
    %469 = vmatmul.f32.gmra.mxu0 %v448
    %v470 = vpop.f32.mrf.mxu0
    %v471 = vadd.f32 %v126, %v470
    %472 = vdwg.mxu0
    %v474 = vsel %vm226, %v379, 0
    %v477 = vsel %vm226, %v412, 0
    %479 = vmatpush.xpose.msra.mxu0 0.0
    %480 = vmatpush.xpose.msra.mxu0 0.0
    %481 = vmatpush.xpose.msra.mxu0 0.0
    %482 = vmatpush.xpose.msra.mxu0 0.0
    %483 = vmatpush.xpose.msra.mxu0 0.0
    %484 = vmatpush.xpose.msra.mxu0 0.0
    %485 = vmatpush.xpose.msra.mxu0 0.0
    %486 = vmatpush.xpose.msra.mxu0 0.0
    %487 = vmatpush.xpose.msra.mxu0 0.0
    %488 = vmatpush.xpose.msra.mxu0 0.0
    %489 = vmatpush.xpose.msra.mxu0 0.0
    %490 = vmatpush.xpose.msra.mxu0 0.0
    %491 = vmatpush.xpose.msra.mxu0 0.0
    %492 = vmatpush.xpose.msra.mxu0 0.0
    %493 = vmatpush.xpose.msra.mxu0 0.0
    %494 = vmatpush.xpose.msra.mxu0 %v477
    %495 = vmatmul.f32.gmra.mxu0 %v474
    %v496 = vpop.f32.mrf.mxu0
    %v497 = vadd.f32 %v126, %v496
    %498 = vdwg.mxu0
    %v499 = vsel %vm226, %v471, -inf
    %500 = vmax.xlane.f32.xlu0 %v499
    %v501 = vpop.xlane.xlu0 %500
    %v502 = vsel %vm226, %v497, -inf
    %503 = vmax.xlane.f32.xlu0 %v502
    %v504 = vpop.xlane.xlu0 %503
    %v505 = vsub.f32 %v471, %v501
    %v506 = vsub.f32 %v497, %v504
    %v507 = vmul.f32 %v505, 1.442695
    %v508 = vpow.pop %v507
    %v509 = vmul.f32 %v506, 1.442695
    %v510 = vpow.pop %v509
    %v511 = vsel %vm226, %v508, 0.0
    %512 = vadd.xlane.f32.xlu0 %v511
    %v513 = vpop.xlane.xlu0 %512
    %v514 = vsel %vm226, %v510, 0.0
    %515 = vadd.xlane.f32.xlu0 %v514
    %v516 = vpop.xlane.xlu0 %515
    %v517 = vrcp.pop %v513
    %v518 = vrcp.pop %v516
    %v519 = vmul.f32 %v508, %v517
    %v520 = vmul.f32 %v510, %v518
    %v522 = vsel %vm226, %v519, 0
    %524 = vmatpush.msra.mxu0 0.0
    %525 = vmatpush.msra.mxu0 0.0
    %526 = vmatpush.msra.mxu0 0.0
    %527 = vmatpush.msra.mxu0 0.0
    %528 = vmatpush.msra.mxu0 0.0
    %529 = vmatpush.msra.mxu0 0.0
    %530 = vmatpush.msra.mxu0 0.0
    %531 = vmatpush.msra.mxu0 0.0
    %532 = vmatpush.msra.mxu0 0.0
    %533 = vmatpush.msra.mxu0 0.0
    %534 = vmatpush.msra.mxu0 0.0
    %535 = vmatpush.msra.mxu0 0.0
    %536 = vmatpush.msra.mxu0 0.0
    %537 = vmatpush.msra.mxu0 0.0
    %538 = vmatpush.msra.mxu0 0.0
    %539 = vmatpush.msra.mxu0 %v442
    %540 = vmatmul.f32.gmra.mxu0 %v522
    %v541 = vpop.f32.mrf.mxu0
    %v542 = vadd.f32 0.0, %v541
    %543 = vdwg.mxu0
    %v545 = vsel %vm226, %v520, 0
    %547 = vmatpush.msra.mxu0 0.0
    %548 = vmatpush.msra.mxu0 0.0
    %549 = vmatpush.msra.mxu0 0.0
    %550 = vmatpush.msra.mxu0 0.0
    %551 = vmatpush.msra.mxu0 0.0
    %552 = vmatpush.msra.mxu0 0.0
    %553 = vmatpush.msra.mxu0 0.0
    %554 = vmatpush.msra.mxu0 0.0
    %555 = vmatpush.msra.mxu0 0.0
    %556 = vmatpush.msra.mxu0 0.0
    %557 = vmatpush.msra.mxu0 0.0
    %558 = vmatpush.msra.mxu0 0.0
    %559 = vmatpush.msra.mxu0 0.0
    %560 = vmatpush.msra.mxu0 0.0
    %561 = vmatpush.msra.mxu0 0.0
    %562 = vmatpush.msra.mxu0 %v445
    %563 = vmatmul.f32.gmra.mxu0 %v545
    %v564 = vpop.f32.mrf.mxu0
    %v565 = vadd.f32 0.0, %v564
    %566 = vdwg.mxu0
    %s567 = scalar_lea.vmem %s10, 8
    %v568 = vld [vmem:[%s567] sm:$0xff]
    %v570 = vsel %vm226, %v542, 0
    %v573 = vsel %vm226, %v565, 0
    %575 = vmatpush.msra.mxu0 0.0
    %576 = vmatpush.msra.mxu0 0.0
    %577 = vmatpush.msra.mxu0 0.0
    %578 = vmatpush.msra.mxu0 0.0
    %579 = vmatpush.msra.mxu0 0.0
    %580 = vmatpush.msra.mxu0 0.0
    %581 = vmatpush.msra.mxu0 0.0
    %582 = vmatpush.msra.mxu0 0.0
    %583 = vmatpush.msra.mxu0 0.0
    %584 = vmatpush.msra.mxu0 0.0
    %585 = vmatpush.msra.mxu0 0.0
    %586 = vmatpush.msra.mxu0 0.0
    %587 = vmatpush.msra.mxu0 0.0
    %588 = vmatpush.msra.mxu0 0.0
    %589 = vmatpush.msra.mxu0 0.0
    %590 = vmatpush.msra.mxu0 %v568
    %591 = vmatmul.f32.gmra.mxu0 %v570
    %v592 = vpop.f32.mrf.mxu0
    %v593 = vadd.f32 0.0, %v592
    %594 = vmatmul.f32.gmra.mxu0 %v573
    %v595 = vpop.f32.mrf.mxu0
    %v596 = vadd.f32 0.0, %v595
    %597 = vdwg.mxu0
    %v599 = vsel %vm226, %v322, 0
    %v602 = vsel %vm226, %v345, 0
    %604 = vmatpush.msra.mxu0 0.0
    %605 = vmatpush.msra.mxu0 0.0
    %606 = vmatpush.msra.mxu0 0.0
    %607 = vmatpush.msra.mxu0 0.0
    %608 = vmatpush.msra.mxu0 0.0
    %609 = vmatpush.msra.mxu0 0.0
    %610 = vmatpush.msra.mxu0 0.0
    %611 = vmatpush.msra.mxu0 0.0
    %612 = vmatpush.msra.mxu0 0.0
    %613 = vmatpush.msra.mxu0 0.0
    %614 = vmatpush.msra.mxu0 0.0
    %615 = vmatpush.msra.mxu0 0.0
    %616 = vmatpush.msra.mxu0 0.0
    %617 = vmatpush.msra.mxu0 0.0
    %618 = vmatpush.msra.mxu0 0.0
    %619 = vmatpush.msra.mxu0 %v347
    %620 = vmatmul.f32.gmra.mxu0 %v599
    %v621 = vpop.f32.mrf.mxu0
    %v622 = vadd.f32 %v593, %v621
    %623 = vmatmul.f32.gmra.mxu0 %v602
    %v624 = vpop.f32.mrf.mxu0
    %v625 = vadd.f32 %v596, %v624
    %626 = vdwg.mxu0
    %s627 = scalar_lea.vmem %s4, 64
    %v628 = vld [vmem:[%s627] sm:$0xff]
    %v629 = vld [vmem:[%s627 + $0x8] sm:$0xff]
    %v630 = vld [vmem:[%s627 + $0x10] sm:$0xff]
    %v631 = vld [vmem:[%s627 + $0x18] sm:$0xff]
    %s632 = scalar_lea.vmem %s5, 2
    %v633 = vld [vmem:[%s632] sm:$0x1]
    %v635 = vperm.slane %v633, 0
    %637 = vmatpush.msra.mxu0 0.0
    %638 = vmatpush.msra.mxu0 0.0
    %639 = vmatpush.msra.mxu0 0.0
    %640 = vmatpush.msra.mxu0 0.0
    %641 = vmatpush.msra.mxu0 0.0
    %642 = vmatpush.msra.mxu0 0.0
    %643 = vmatpush.msra.mxu0 0.0
    %644 = vmatpush.msra.mxu0 0.0
    %645 = vmatpush.msra.mxu0 0.0
    %646 = vmatpush.msra.mxu0 0.0
    %647 = vmatpush.msra.mxu0 0.0
    %648 = vmatpush.msra.mxu0 0.0
    %649 = vmatpush.msra.mxu0 %v631
    %650 = vmatpush.msra.mxu0 %v630
    %651 = vmatpush.msra.mxu0 %v629
    %652 = vmatpush.msra.mxu0 %v628
    %653 = vmatmul.f32.gmra.mxu0 %v136
    %v654 = vpop.f32.mrf.mxu0
    %v655 = vadd.f32 %v635, %v654
    %656 = vmatmul.f32.gmra.mxu0 %v139
    %v657 = vpop.f32.mrf.mxu0
    %v658 = vadd.f32 %v635, %v657
    %659 = vdwg.mxu0
    %s660 = scalar_lea.vmem %s6, 64
    %v661 = vld [vmem:[%s660] sm:$0xff]
    %v662 = vld [vmem:[%s660 + $0x8] sm:$0xff]
    %v663 = vld [vmem:[%s660 + $0x10] sm:$0xff]
    %v664 = vld [vmem:[%s660 + $0x18] sm:$0xff]
    %s665 = scalar_lea.vmem %s7, 2
    %v666 = vld [vmem:[%s665] sm:$0x1]
    %v668 = vperm.slane %v666, 0
    %670 = vmatpush.msra.mxu0 0.0
    %671 = vmatpush.msra.mxu0 0.0
    %672 = vmatpush.msra.mxu0 0.0
    %673 = vmatpush.msra.mxu0 0.0
    %674 = vmatpush.msra.mxu0 0.0
    %675 = vmatpush.msra.mxu0 0.0
    %676 = vmatpush.msra.mxu0 0.0
    %677 = vmatpush.msra.mxu0 0.0
    %678 = vmatpush.msra.mxu0 0.0
    %679 = vmatpush.msra.mxu0 0.0
    %680 = vmatpush.msra.mxu0 0.0
    %681 = vmatpush.msra.mxu0 0.0
    %682 = vmatpush.msra.mxu0 %v664
    %683 = vmatpush.msra.mxu0 %v663
    %684 = vmatpush.msra.mxu0 %v662
    %685 = vmatpush.msra.mxu0 %v661
    %686 = vmatmul.f32.gmra.mxu0 %v136
    %v687 = vpop.f32.mrf.mxu0
    %v688 = vadd.f32 %v668, %v687
    %689 = vmatmul.f32.gmra.mxu0 %v139
    %v690 = vpop.f32.mrf.mxu0
    %v691 = vadd.f32 %v668, %v690
    %692 = vdwg.mxu0
    %s693 = scalar_lea.vmem %s8, 64
    %v694 = vld [vmem:[%s693] sm:$0xff]
    %v695 = vld [vmem:[%s693 + $0x8] sm:$0xff]
    %v696 = vld [vmem:[%s693 + $0x10] sm:$0xff]
    %v697 = vld [vmem:[%s693 + $0x18] sm:$0xff]
    %s698 = scalar_lea.vmem %s9, 2
    %v699 = vld [vmem:[%s698] sm:$0x1]
    %v701 = vperm.slane %v699, 0
    %703 = vmatpush.msra.mxu0 0.0
    %704 = vmatpush.msra.mxu0 0.0
    %705 = vmatpush.msra.mxu0 0.0
    %706 = vmatpush.msra.mxu0 0.0
    %707 = vmatpush.msra.mxu0 0.0
    %708 = vmatpush.msra.mxu0 0.0
    %709 = vmatpush.msra.mxu0 0.0
    %710 = vmatpush.msra.mxu0 0.0
    %711 = vmatpush.msra.mxu0 0.0
    %712 = vmatpush.msra.mxu0 0.0
    %713 = vmatpush.msra.mxu0 0.0
    %714 = vmatpush.msra.mxu0 0.0
    %715 = vmatpush.msra.mxu0 %v697
    %716 = vmatpush.msra.mxu0 %v696
    %717 = vmatpush.msra.mxu0 %v695
    %718 = vmatpush.msra.mxu0 %v694
    %719 = vmatmul.f32.gmra.mxu0 %v136
    %v720 = vpop.f32.mrf.mxu0
    %v721 = vadd.f32 %v701, %v720
    %722 = vmatmul.f32.gmra.mxu0 %v139
    %v723 = vpop.f32.mrf.mxu0
    %v724 = vadd.f32 %v701, %v723
    %725 = vdwg.mxu0
    %v727 = vsel %vm226, %v655, 0
    %v730 = vsel %vm226, %v688, 0
    %732 = vmatpush.xpose.msra.mxu0 0.0
    %733 = vmatpush.xpose.msra.mxu0 0.0
    %734 = vmatpush.xpose.msra.mxu0 0.0
    %735 = vmatpush.xpose.msra.mxu0 0.0
    %736 = vmatpush.xpose.msra.mxu0 0.0
    %737 = vmatpush.xpose.msra.mxu0 0.0
    %738 = vmatpush.xpose.msra.mxu0 0.0
    %739 = vmatpush.xpose.msra.mxu0 0.0
    %740 = vmatpush.xpose.msra.mxu0 0.0
    %741 = vmatpush.xpose.msra.mxu0 0.0
    %742 = vmatpush.xpose.msra.mxu0 0.0
    %743 = vmatpush.xpose.msra.mxu0 0.0
    %744 = vmatpush.xpose.msra.mxu0 0.0
    %745 = vmatpush.xpose.msra.mxu0 0.0
    %746 = vmatpush.xpose.msra.mxu0 0.0
    %747 = vmatpush.xpose.msra.mxu0 %v730
    %748 = vmatmul.f32.gmra.mxu0 %v727
    %v749 = vpop.f32.mrf.mxu0
    %v750 = vadd.f32 %v126, %v749
    %751 = vdwg.mxu0
    %v753 = vsel %vm226, %v658, 0
    %v756 = vsel %vm226, %v691, 0
    %758 = vmatpush.xpose.msra.mxu0 0.0
    %759 = vmatpush.xpose.msra.mxu0 0.0
    %760 = vmatpush.xpose.msra.mxu0 0.0
    %761 = vmatpush.xpose.msra.mxu0 0.0
    %762 = vmatpush.xpose.msra.mxu0 0.0
    %763 = vmatpush.xpose.msra.mxu0 0.0
    %764 = vmatpush.xpose.msra.mxu0 0.0
    %765 = vmatpush.xpose.msra.mxu0 0.0
    %766 = vmatpush.xpose.msra.mxu0 0.0
    %767 = vmatpush.xpose.msra.mxu0 0.0
    %768 = vmatpush.xpose.msra.mxu0 0.0
    %769 = vmatpush.xpose.msra.mxu0 0.0
    %770 = vmatpush.xpose.msra.mxu0 0.0
    %771 = vmatpush.xpose.msra.mxu0 0.0
    %772 = vmatpush.xpose.msra.mxu0 0.0
    %773 = vmatpush.xpose.msra.mxu0 %v756
    %774 = vmatmul.f32.gmra.mxu0 %v753
    %v775 = vpop.f32.mrf.mxu0
    %v776 = vadd.f32 %v126, %v775
    %777 = vdwg.mxu0
    %v778 = vsel %vm226, %v750, -inf
    %779 = vmax.xlane.f32.xlu0 %v778
    %v780 = vpop.xlane.xlu0 %779
    %v781 = vsel %vm226, %v776, -inf
    %782 = vmax.xlane.f32.xlu0 %v781
    %v783 = vpop.xlane.xlu0 %782
    %v784 = vsub.f32 %v750, %v780
    %v785 = vsub.f32 %v776, %v783
    %v786 = vmul.f32 %v784, 1.442695
    %v787 = vpow.pop %v786
    %v788 = vmul.f32 %v785, 1.442695
    %v789 = vpow.pop %v788
    %v790 = vsel %vm226, %v787, 0.0
    %791 = vadd.xlane.f32.xlu0 %v790
    %v792 = vpop.xlane.xlu0 %791
    %v793 = vsel %vm226, %v789, 0.0
    %794 = vadd.xlane.f32.xlu0 %v793
    %v795 = vpop.xlane.xlu0 %794
    %v796 = vrcp.pop %v792
    %v797 = vrcp.pop %v795
    %v798 = vmul.f32 %v787, %v796
    %v799 = vmul.f32 %v789, %v797
    %v801 = vsel %vm226, %v798, 0
    %803 = vmatpush.msra.mxu0 0.0
    %804 = vmatpush.msra.mxu0 0.0
    %805 = vmatpush.msra.mxu0 0.0
    %806 = vmatpush.msra.mxu0 0.0
    %807 = vmatpush.msra.mxu0 0.0
    %808 = vmatpush.msra.mxu0 0.0
    %809 = vmatpush.msra.mxu0 0.0
    %810 = vmatpush.msra.mxu0 0.0
    %811 = vmatpush.msra.mxu0 0.0
    %812 = vmatpush.msra.mxu0 0.0
    %813 = vmatpush.msra.mxu0 0.0
    %814 = vmatpush.msra.mxu0 0.0
    %815 = vmatpush.msra.mxu0 0.0
    %816 = vmatpush.msra.mxu0 0.0
    %817 = vmatpush.msra.mxu0 0.0
    %818 = vmatpush.msra.mxu0 %v721
    %819 = vmatmul.f32.gmra.mxu0 %v801
    %v820 = vpop.f32.mrf.mxu0
    %v821 = vadd.f32 0.0, %v820
    %822 = vdwg.mxu0
    %v824 = vsel %vm226, %v799, 0
    %826 = vmatpush.msra.mxu0 0.0
    %827 = vmatpush.msra.mxu0 0.0
    %828 = vmatpush.msra.mxu0 0.0
    %829 = vmatpush.msra.mxu0 0.0
    %830 = vmatpush.msra.mxu0 0.0
    %831 = vmatpush.msra.mxu0 0.0
    %832 = vmatpush.msra.mxu0 0.0
    %833 = vmatpush.msra.mxu0 0.0
    %834 = vmatpush.msra.mxu0 0.0
    %835 = vmatpush.msra.mxu0 0.0
    %836 = vmatpush.msra.mxu0 0.0
    %837 = vmatpush.msra.mxu0 0.0
    %838 = vmatpush.msra.mxu0 0.0
    %839 = vmatpush.msra.mxu0 0.0
    %840 = vmatpush.msra.mxu0 0.0
    %841 = vmatpush.msra.mxu0 %v724
    %842 = vmatmul.f32.gmra.mxu0 %v824
    %v843 = vpop.f32.mrf.mxu0
    %v844 = vadd.f32 0.0, %v843
    %845 = vdwg.mxu0
    %s846 = scalar_lea.vmem %s10, 16
    %v847 = vld [vmem:[%s846] sm:$0xff]
    %v849 = vsel %vm226, %v821, 0
    %v852 = vsel %vm226, %v844, 0
    %854 = vmatpush.msra.mxu0 0.0
    %855 = vmatpush.msra.mxu0 0.0
    %856 = vmatpush.msra.mxu0 0.0
    %857 = vmatpush.msra.mxu0 0.0
    %858 = vmatpush.msra.mxu0 0.0
    %859 = vmatpush.msra.mxu0 0.0
    %860 = vmatpush.msra.mxu0 0.0
    %861 = vmatpush.msra.mxu0 0.0
    %862 = vmatpush.msra.mxu0 0.0
    %863 = vmatpush.msra.mxu0 0.0
    %864 = vmatpush.msra.mxu0 0.0
    %865 = vmatpush.msra.mxu0 0.0
    %866 = vmatpush.msra.mxu0 0.0
    %867 = vmatpush.msra.mxu0 0.0
    %868 = vmatpush.msra.mxu0 0.0
    %869 = vmatpush.msra.mxu0 %v847
    %870 = vmatmul.f32.gmra.mxu0 %v849
    %v871 = vpop.f32.mrf.mxu0
    %v872 = vadd.f32 0.0, %v871
    %873 = vmatmul.f32.gmra.mxu0 %v852
    %v874 = vpop.f32.mrf.mxu0
    %v875 = vadd.f32 0.0, %v874
    %876 = vdwg.mxu0
    %v877 = vadd.f32 %v622, %v872
    %v878 = vadd.f32 %v625, %v875
    %s879 = scalar_lea.vmem %s4, 96
    %v880 = vld [vmem:[%s879] sm:$0xff]
    %v881 = vld [vmem:[%s879 + $0x8] sm:$0xff]
    %v882 = vld [vmem:[%s879 + $0x10] sm:$0xff]
    %v883 = vld [vmem:[%s879 + $0x18] sm:$0xff]
    %s884 = scalar_lea.vmem %s5, 3
    %v885 = vld [vmem:[%s884] sm:$0x1]
    %v887 = vperm.slane %v885, 0
    %889 = vmatpush.msra.mxu0 0.0
    %890 = vmatpush.msra.mxu0 0.0
    %891 = vmatpush.msra.mxu0 0.0
    %892 = vmatpush.msra.mxu0 0.0
    %893 = vmatpush.msra.mxu0 0.0
    %894 = vmatpush.msra.mxu0 0.0
    %895 = vmatpush.msra.mxu0 0.0
    %896 = vmatpush.msra.mxu0 0.0
    %897 = vmatpush.msra.mxu0 0.0
    %898 = vmatpush.msra.mxu0 0.0
    %899 = vmatpush.msra.mxu0 0.0
    %900 = vmatpush.msra.mxu0 0.0
    %901 = vmatpush.msra.mxu0 %v883
    %902 = vmatpush.msra.mxu0 %v882
    %903 = vmatpush.msra.mxu0 %v881
    %904 = vmatpush.msra.mxu0 %v880
    %905 = vmatmul.f32.gmra.mxu0 %v136
    %v906 = vpop.f32.mrf.mxu0
    %v907 = vadd.f32 %v887, %v906
    %908 = vmatmul.f32.gmra.mxu0 %v139
    %v909 = vpop.f32.mrf.mxu0
    %v910 = vadd.f32 %v887, %v909
    %911 = vdwg.mxu0
    %s912 = scalar_lea.vmem %s6, 96
    %v913 = vld [vmem:[%s912] sm:$0xff]
    %v914 = vld [vmem:[%s912 + $0x8] sm:$0xff]
    %v915 = vld [vmem:[%s912 + $0x10] sm:$0xff]
    %v916 = vld [vmem:[%s912 + $0x18] sm:$0xff]
    %s917 = scalar_lea.vmem %s7, 3
    %v918 = vld [vmem:[%s917] sm:$0x1]
    %v920 = vperm.slane %v918, 0
    %922 = vmatpush.msra.mxu0 0.0
    %923 = vmatpush.msra.mxu0 0.0
    %924 = vmatpush.msra.mxu0 0.0
    %925 = vmatpush.msra.mxu0 0.0
    %926 = vmatpush.msra.mxu0 0.0
    %927 = vmatpush.msra.mxu0 0.0
    %928 = vmatpush.msra.mxu0 0.0
    %929 = vmatpush.msra.mxu0 0.0
    %930 = vmatpush.msra.mxu0 0.0
    %931 = vmatpush.msra.mxu0 0.0
    %932 = vmatpush.msra.mxu0 0.0
    %933 = vmatpush.msra.mxu0 0.0
    %934 = vmatpush.msra.mxu0 %v916
    %935 = vmatpush.msra.mxu0 %v915
    %936 = vmatpush.msra.mxu0 %v914
    %937 = vmatpush.msra.mxu0 %v913
    %938 = vmatmul.f32.gmra.mxu0 %v136
    %v939 = vpop.f32.mrf.mxu0
    %v940 = vadd.f32 %v920, %v939
    %941 = vmatmul.f32.gmra.mxu0 %v139
    %v942 = vpop.f32.mrf.mxu0
    %v943 = vadd.f32 %v920, %v942
    %944 = vdwg.mxu0
    %s945 = scalar_lea.vmem %s8, 96
    %v946 = vld [vmem:[%s945] sm:$0xff]
    %v947 = vld [vmem:[%s945 + $0x8] sm:$0xff]
    %v948 = vld [vmem:[%s945 + $0x10] sm:$0xff]
    %v949 = vld [vmem:[%s945 + $0x18] sm:$0xff]
    %s950 = scalar_lea.vmem %s9, 3
    %v951 = vld [vmem:[%s950] sm:$0x1]
    %v953 = vperm.slane %v951, 0
    %955 = vmatpush.msra.mxu0 0.0
    %956 = vmatpush.msra.mxu0 0.0
    %957 = vmatpush.msra.mxu0 0.0
    %958 = vmatpush.msra.mxu0 0.0
    %959 = vmatpush.msra.mxu0 0.0
    %960 = vmatpush.msra.mxu0 0.0
    %961 = vmatpush.msra.mxu0 0.0
    %962 = vmatpush.msra.mxu0 0.0
    %963 = vmatpush.msra.mxu0 0.0
    %964 = vmatpush.msra.mxu0 0.0
    %965 = vmatpush.msra.mxu0 0.0
    %966 = vmatpush.msra.mxu0 0.0
    %967 = vmatpush.msra.mxu0 %v949
    %968 = vmatpush.msra.mxu0 %v948
    %969 = vmatpush.msra.mxu0 %v947
    %970 = vmatpush.msra.mxu0 %v946
    %971 = vmatmul.f32.gmra.mxu0 %v136
    %v972 = vpop.f32.mrf.mxu0
    %v973 = vadd.f32 %v953, %v972
    %974 = vmatmul.f32.gmra.mxu0 %v139
    %v975 = vpop.f32.mrf.mxu0
    %v976 = vadd.f32 %v953, %v975
    %977 = vdwg.mxu0
    %v979 = vsel %vm226, %v907, 0
    %v982 = vsel %vm226, %v940, 0
    %984 = vmatpush.xpose.msra.mxu0 0.0
    %985 = vmatpush.xpose.msra.mxu0 0.0
    %986 = vmatpush.xpose.msra.mxu0 0.0
    %987 = vmatpush.xpose.msra.mxu0 0.0
    %988 = vmatpush.xpose.msra.mxu0 0.0
    %989 = vmatpush.xpose.msra.mxu0 0.0
    %990 = vmatpush.xpose.msra.mxu0 0.0
    %991 = vmatpush.xpose.msra.mxu0 0.0
    %992 = vmatpush.xpose.msra.mxu0 0.0
    %993 = vmatpush.xpose.msra.mxu0 0.0
    %994 = vmatpush.xpose.msra.mxu0 0.0
    %995 = vmatpush.xpose.msra.mxu0 0.0
    %996 = vmatpush.xpose.msra.mxu0 0.0
    %997 = vmatpush.xpose.msra.mxu0 0.0
    %998 = vmatpush.xpose.msra.mxu0 0.0
    %999 = vmatpush.xpose.msra.mxu0 %v982
    %1000 = vmatmul.f32.gmra.mxu0 %v979
    %v1001 = vpop.f32.mrf.mxu0
    %v1002 = vadd.f32 %v126, %v1001
    %1003 = vdwg.mxu0
    %v1005 = vsel %vm226, %v910, 0
    %v1008 = vsel %vm226, %v943, 0
    %1010 = vmatpush.xpose.msra.mxu0 0.0
    %1011 = vmatpush.xpose.msra.mxu0 0.0
    %1012 = vmatpush.xpose.msra.mxu0 0.0
    %1013 = vmatpush.xpose.msra.mxu0 0.0
    %1014 = vmatpush.xpose.msra.mxu0 0.0
    %1015 = vmatpush.xpose.msra.mxu0 0.0
    %1016 = vmatpush.xpose.msra.mxu0 0.0
    %1017 = vmatpush.xpose.msra.mxu0 0.0
    %1018 = vmatpush.xpose.msra.mxu0 0.0
    %1019 = vmatpush.xpose.msra.mxu0 0.0
    %1020 = vmatpush.xpose.msra.mxu0 0.0
    %1021 = vmatpush.xpose.msra.mxu0 0.0
    %1022 = vmatpush.xpose.msra.mxu0 0.0
    %1023 = vmatpush.xpose.msra.mxu0 0.0
    %1024 = vmatpush.xpose.msra.mxu0 0.0
    %1025 = vmatpush.xpose.msra.mxu0 %v1008
    %1026 = vmatmul.f32.gmra.mxu0 %v1005
    %v1027 = vpop.f32.mrf.mxu0
    %v1028 = vadd.f32 %v126, %v1027
    %1029 = vdwg.mxu0
    %v1030 = vsel %vm226, %v1002, -inf
    %1031 = vmax.xlane.f32.xlu0 %v1030
    %v1032 = vpop.xlane.xlu0 %1031
    %v1033 = vsel %vm226, %v1028, -inf
    %1034 = vmax.xlane.f32.xlu0 %v1033
    %v1035 = vpop.xlane.xlu0 %1034
    %v1036 = vsub.f32 %v1002, %v1032
    %v1037 = vsub.f32 %v1028, %v1035
    %v1038 = vmul.f32 %v1036, 1.442695
    %v1039 = vpow.pop %v1038
    %v1040 = vmul.f32 %v1037, 1.442695
    %v1041 = vpow.pop %v1040
    %v1042 = vsel %vm226, %v1039, 0.0
    %1043 = vadd.xlane.f32.xlu0 %v1042
    %v1044 = vpop.xlane.xlu0 %1043
    %v1045 = vsel %vm226, %v1041, 0.0
    %1046 = vadd.xlane.f32.xlu0 %v1045
    %v1047 = vpop.xlane.xlu0 %1046
    %v1048 = vrcp.pop %v1044
    %v1049 = vrcp.pop %v1047
    %v1050 = vmul.f32 %v1039, %v1048
    %v1051 = vmul.f32 %v1041, %v1049
    %v1053 = vsel %vm226, %v1050, 0
    %1055 = vmatpush.msra.mxu0 0.0
    %1056 = vmatpush.msra.mxu0 0.0
    %1057 = vmatpush.msra.mxu0 0.0
    %1058 = vmatpush.msra.mxu0 0.0
    %1059 = vmatpush.msra.mxu0 0.0
    %1060 = vmatpush.msra.mxu0 0.0
    %1061 = vmatpush.msra.mxu0 0.0
    %1062 = vmatpush.msra.mxu0 0.0
    %1063 = vmatpush.msra.mxu0 0.0
    %1064 = vmatpush.msra.mxu0 0.0
    %1065 = vmatpush.msra.mxu0 0.0
    %1066 = vmatpush.msra.mxu0 0.0
    %1067 = vmatpush.msra.mxu0 0.0
    %1068 = vmatpush.msra.mxu0 0.0
    %1069 = vmatpush.msra.mxu0 0.0
    %1070 = vmatpush.msra.mxu0 %v973
    %1071 = vmatmul.f32.gmra.mxu0 %v1053
    %v1072 = vpop.f32.mrf.mxu0
    %v1073 = vadd.f32 0.0, %v1072
    %1074 = vdwg.mxu0
    %v1076 = vsel %vm226, %v1051, 0
    %1078 = vmatpush.msra.mxu0 0.0
    %1079 = vmatpush.msra.mxu0 0.0
    %1080 = vmatpush.msra.mxu0 0.0
    %1081 = vmatpush.msra.mxu0 0.0
    %1082 = vmatpush.msra.mxu0 0.0
    %1083 = vmatpush.msra.mxu0 0.0
    %1084 = vmatpush.msra.mxu0 0.0
    %1085 = vmatpush.msra.mxu0 0.0
    %1086 = vmatpush.msra.mxu0 0.0
    %1087 = vmatpush.msra.mxu0 0.0
    %1088 = vmatpush.msra.mxu0 0.0
    %1089 = vmatpush.msra.mxu0 0.0
    %1090 = vmatpush.msra.mxu0 0.0
    %1091 = vmatpush.msra.mxu0 0.0
    %1092 = vmatpush.msra.mxu0 0.0
    %1093 = vmatpush.msra.mxu0 %v976
    %1094 = vmatmul.f32.gmra.mxu0 %v1076
    %v1095 = vpop.f32.mrf.mxu0
    %v1096 = vadd.f32 0.0, %v1095
    %1097 = vdwg.mxu0
    %s1098 = scalar_lea.vmem %s10, 24
    %v1099 = vld [vmem:[%s1098] sm:$0xff]
    %v1101 = vsel %vm226, %v1073, 0
    %v1104 = vsel %vm226, %v1096, 0
    %1106 = vmatpush.msra.mxu0 0.0
    %1107 = vmatpush.msra.mxu0 0.0
    %1108 = vmatpush.msra.mxu0 0.0
    %1109 = vmatpush.msra.mxu0 0.0
    %1110 = vmatpush.msra.mxu0 0.0
    %1111 = vmatpush.msra.mxu0 0.0
    %1112 = vmatpush.msra.mxu0 0.0
    %1113 = vmatpush.msra.mxu0 0.0
    %1114 = vmatpush.msra.mxu0 0.0
    %1115 = vmatpush.msra.mxu0 0.0
    %1116 = vmatpush.msra.mxu0 0.0
    %1117 = vmatpush.msra.mxu0 0.0
    %1118 = vmatpush.msra.mxu0 0.0
    %1119 = vmatpush.msra.mxu0 0.0
    %1120 = vmatpush.msra.mxu0 0.0
    %1121 = vmatpush.msra.mxu0 %v1099
    %1122 = vmatmul.f32.gmra.mxu0 %v1101
    %v1123 = vpop.f32.mrf.mxu0
    %v1124 = vadd.f32 0.0, %v1123
    %1125 = vmatmul.f32.gmra.mxu0 %v1104
    %v1126 = vpop.f32.mrf.mxu0
    %v1127 = vadd.f32 0.0, %v1126
    %1128 = vdwg.mxu0
    %v1129 = vadd.f32 %v877, %v1124
    %v1130 = vadd.f32 %v878, %v1127
    %v1131 = vadd.f32 %v60, %v1129
    %v1132 = vadd.f32 %v61, %v1130
    %v1133 = vld [vmem:[%s11] sm:$0x1]
    %v1135 = vperm.slane %v1133, 0
    %v1137 = vadd.f32 %v1131, %v1135
    %v1138 = vadd.f32 %v1132, %v1135
    %v1139 = vld [vmem:[%s12] sm:$0x1]
    %v1140 = vld [vmem:[%s13] sm:$0x1]
    %v1141 = vsel %vm64, %v1137, 0.0
    %1142 = vadd.xlane.f32.xlu0 %v1141
    %v1143 = vpop.xlane.xlu0 %1142
    %v1144 = vsel %vm64, %v1138, 0.0
    %1145 = vadd.xlane.f32.xlu0 %v1144
    %v1146 = vpop.xlane.xlu0 %1145
    %v1147 = vmul.f32 %v1143, %v77
    %v1148 = vmul.f32 %v1146, %v77
    %v1149 = vsub.f32 %v1137, %v1147
    %v1150 = vsub.f32 %v1138, %v1148
    %v1151 = vmul.f32 %v1149, %v1149
    %v1152 = vmul.f32 %v1150, %v1150
    %v1153 = vsel %vm64, %v1151, 0.0
    %1154 = vadd.xlane.f32.xlu0 %v1153
    %v1155 = vpop.xlane.xlu0 %1154
    %v1156 = vsel %vm64, %v1152, 0.0
    %1157 = vadd.xlane.f32.xlu0 %v1156
    %v1158 = vpop.xlane.xlu0 %1157
    %v1159 = vmul.f32 %v1155, %v77
    %v1160 = vmul.f32 %v1158, %v77
    %v1161 = vadd.f32 %v1159, 1e-05
    %v1162 = vadd.f32 %v1160, 1e-05
    %v1163 = vrsqrt.pop %v1161
    %v1164 = vmul.f32 %v1163, %v1161
    %v1165 = vmul.f32 %v1164, %v1163
    %v1166 = vmul.f32 0.5, %v1165
    %v1167 = vsub.f32 1.5, %v1166
    %v1168 = vmul.f32 %v1163, %v1167
    %vm1169 = vweird.f32 %v1161
    %vm1170 = vweird.f32 %v1163
    %vm1171 = vmor %vm1169, %vm1170
    %v1172 = vsel %vm1171, %v1163, %v1168
    %v1173 = vrsqrt.pop %v1162
    %v1174 = vmul.f32 %v1173, %v1162
    %v1175 = vmul.f32 %v1174, %v1173
    %v1176 = vmul.f32 0.5, %v1175
    %v1177 = vsub.f32 1.5, %v1176
    %v1178 = vmul.f32 %v1173, %v1177
    %vm1179 = vweird.f32 %v1162
    %vm1180 = vweird.f32 %v1173
    %vm1181 = vmor %vm1179, %vm1180
    %v1182 = vsel %vm1181, %v1173, %v1178
    %v1183 = vmul.f32 %v1149, %v1172
    %v1184 = vmul.f32 %v1150, %v1182
    %v1186 = vperm.slane %v1139, 0
    %v1188 = vmul.f32 %v1183, %v1186
    %v1189 = vmul.f32 %v1184, %v1186
    %v1191 = vperm.slane %v1140, 0
    %v1193 = vadd.f32 %v1188, %v1191
    %v1194 = vadd.f32 %v1189, %v1191
    %v1195 = vld [vmem:[%s14] sm:$0xff]
    %v1196 = vld [vmem:[%s14 + $0x8] sm:$0xff]
    %v1197 = vld [vmem:[%s14 + $0x10] sm:$0xff]
    %v1198 = vld [vmem:[%s14 + $0x18] sm:$0xff]
    %v1199 = vld [vmem:[%s15] sm:$0x1]
    %v1201 = vperm.slane %v1199, 0
    %v1204 = vsel %vm64, %v1193, 0
    %v1207 = vsel %vm64, %v1194, 0
    %1209 = vmatpush.msra.mxu0 0.0
    %1210 = vmatpush.msra.mxu0 0.0
    %1211 = vmatpush.msra.mxu0 0.0
    %1212 = vmatpush.msra.mxu0 0.0
    %1213 = vmatpush.msra.mxu0 0.0
    %1214 = vmatpush.msra.mxu0 0.0
    %1215 = vmatpush.msra.mxu0 0.0
    %1216 = vmatpush.msra.mxu0 0.0
    %1217 = vmatpush.msra.mxu0 0.0
    %1218 = vmatpush.msra.mxu0 0.0
    %1219 = vmatpush.msra.mxu0 0.0
    %1220 = vmatpush.msra.mxu0 0.0
    %1221 = vmatpush.msra.mxu0 %v1198
    %1222 = vmatpush.msra.mxu0 %v1197
    %1223 = vmatpush.msra.mxu0 %v1196
    %1224 = vmatpush.msra.mxu0 %v1195
    %1225 = vmatmul.f32.gmra.mxu0 %v1204
    %v1226 = vpop.f32.mrf.mxu0
    %v1227 = vadd.f32 %v1201, %v1226
    %1228 = vmatmul.f32.gmra.mxu0 %v1207
    %v1229 = vpop.f32.mrf.mxu0
    %v1230 = vadd.f32 %v1201, %v1229
    %1231 = vdwg.mxu0
    %v1232 = vmul.f32 %v1227, 1.702
    %v1233 = vmul.f32 %v1230, 1.702
    %v1234 = vxor.u32 %v1232, 2147483648
    %v1235 = vxor.u32 %v1233, 2147483648
    %v1236 = vmul.f32 %v1234, 1.442695
    %v1237 = vpow.pop %v1236
    %v1238 = vmul.f32 %v1235, 1.442695
    %v1239 = vpow.pop %v1238
    %v1240 = vadd.f32 %v1237, 1.0
    %v1241 = vadd.f32 %v1239, 1.0
    %v1242 = vrcp.pop %v1240
    %v1243 = vmul.f32 %v1240, %v1242
    %v1244 = vsub.f32 1.0, %v1243
    %v1245 = vmul.f32 %v1242, %v1244
    %v1246 = vadd.f32 %v1242, %v1245
    %vm1247 = vweird.f32 %v1240
    %vm1248 = vweird.f32 %v1242
    %vm1249 = vmor %vm1247, %vm1248
    %v1250 = vsel %vm1249, %v1242, %v1246
    %v1251 = vand.u32 2147483647, %v1240
    %vm1252 = vcmp.eq.f32.partialorder %v1251, 8.507059e+37
    %v1253 = vand.u32 %v1240, 2147483648
    %v1254 = vor.u32 1.1754944e-38, %v1253
    %v1255 = vsel %vm1252, %v1254, %v1250
    %v1256 = vmul.f32 1.0, %v1255
    %v1257 = vrcp.pop %v1241
    %v1258 = vmul.f32 %v1241, %v1257
    %v1259 = vsub.f32 1.0, %v1258
    %v1260 = vmul.f32 %v1257, %v1259
    %v1261 = vadd.f32 %v1257, %v1260
    %vm1262 = vweird.f32 %v1241
    %vm1263 = vweird.f32 %v1257
    %vm1264 = vmor %vm1262, %vm1263
    %v1265 = vsel %vm1264, %v1257, %v1261
    %v1266 = vand.u32 2147483647, %v1241
    %vm1267 = vcmp.eq.f32.partialorder %v1266, 8.507059e+37
    %v1268 = vand.u32 %v1241, 2147483648
    %v1269 = vor.u32 1.1754944e-38, %v1268
    %v1270 = vsel %vm1267, %v1269, %v1265
    %v1271 = vmul.f32 1.0, %v1270
    %v1272 = vmul.f32 %v1227, %v1256
    %v1273 = vmul.f32 %v1230, %v1271
    %v1274 = vld [vmem:[%s16] sm:$0xff]
    %v1275 = vld [vmem:[%s16 + $0x8] sm:$0xff]
    %v1276 = vld [vmem:[%s16 + $0x10] sm:$0xff]
    %v1277 = vld [vmem:[%s16 + $0x18] sm:$0xff]
    %v1278 = vld [vmem:[%s16 + $0x20] sm:$0xff]
    %v1279 = vld [vmem:[%s16 + $0x28] sm:$0xff]
    %v1280 = vld [vmem:[%s16 + $0x30] sm:$0xff]
    %v1281 = vld [vmem:[%s16 + $0x38] sm:$0xff]
    %v1282 = vld [vmem:[%s16 + $0x40] sm:$0xff]
    %v1283 = vld [vmem:[%s16 + $0x48] sm:$0xff]
    %v1284 = vld [vmem:[%s16 + $0x50] sm:$0xff]
    %v1285 = vld [vmem:[%s16 + $0x58] sm:$0xff]
    %v1286 = vld [vmem:[%s16 + $0x60] sm:$0xff]
    %v1287 = vld [vmem:[%s16 + $0x68] sm:$0xff]
    %v1288 = vld [vmem:[%s16 + $0x70] sm:$0xff]
    %v1289 = vld [vmem:[%s16 + $0x78] sm:$0xff]
    %v1290 = vld [vmem:[%s17] sm:$0x1]
    %v1292 = vperm.slane %v1290, 0
    %1294 = vmatpush.msra.mxu0 %v1289
    %1295 = vmatpush.msra.mxu0 %v1288
    %1296 = vmatpush.msra.mxu0 %v1287
    %1297 = vmatpush.msra.mxu0 %v1286
    %1298 = vmatpush.msra.mxu0 %v1285
    %1299 = vmatpush.msra.mxu0 %v1284
    %1300 = vmatpush.msra.mxu0 %v1283
    %1301 = vmatpush.msra.mxu0 %v1282
    %1302 = vmatpush.msra.mxu0 %v1281
    %1303 = vmatpush.msra.mxu0 %v1280
    %1304 = vmatpush.msra.mxu0 %v1279
    %1305 = vmatpush.msra.mxu0 %v1278
    %1306 = vmatpush.msra.mxu0 %v1277
    %1307 = vmatpush.msra.mxu0 %v1276
    %1308 = vmatpush.msra.mxu0 %v1275
    %1309 = vmatpush.msra.mxu0 %v1274
    %1310 = vmatmul.f32.gmra.mxu0 %v1272
    %v1311 = vpop.f32.mrf.mxu0
    %v1312 = vadd.f32 %v1292, %v1311
    %1313 = vmatmul.f32.gmra.mxu0 %v1273
    %v1314 = vpop.f32.mrf.mxu0
    %v1315 = vadd.f32 %v1292, %v1314
    %1316 = vdwg.mxu0
    %v1317 = vadd.f32 %v1137, %v1312
    %v1318 = vadd.f32 %v1138, %v1315
    %1319 = vst.msk [vmem:[#allocation2] sm:$0xff] %vm64, %v1317
    %1320 = vst.msk [vmem:[#allocation2 + $0x8] sm:$0xff] %vm64, %v1318
    // Predicated region
    $region74: #{tpu_custom_call.1} parent=1 // pred_check
      _
    $region75: #{tpu_custom_call.1} parent=1 // pred_check_branch
      %1322 = sbr.rel (0) target = $region77
    $region76: #{tpu_custom_call.1} parent=1 // pred_region
      %1324 = vsyncadd [#allocation3], 0
      %s1325 = sshll.u32 [#allocation2], 4
      %s1326 = int_to_ptr.vmem [resolvable:$true] %s1325
      %s1327 = sshll.u32 %s18, 4
      %s1328 = int_to_ptr.hbm [resolvable:$true] %s1327
      %1333 = dma.vmem_to_hbm [thread:$0]  %s1326, 256, %s1328, [#allocation3], 128, 128, 8
    $region77: #{tpu_custom_call.1} parent=1 // pred_fallthru
      _
    // Predicated region
    $region78: #{tpu_custom_call.1} parent=1 // pred_check
      _
    $region79: #{tpu_custom_call.1} parent=1 // pred_check_branch
      %1335 = sbr.rel (0) target = $region81
    $region80: #{tpu_custom_call.1} parent=1 // pred_region
      %1337 = dma.done [#allocation3], 256
    $region81: #{tpu_custom_call.1} parent=1 // pred_fallthru
      _
    %1338 = vsyncpa [#allocation3], 1

</llo_original>
